<compile_context>
chip_gen: v7x
topology: tpu7x:2x2x1
jax: 0.10.0
libtpu: 0.0.40
codegen_flags: <defaults>
</compile_context>

<pallas_src>
import functools
import math

import jax
import jax.numpy as jnp
from jax.experimental import pallas as pl
from jax.experimental.pallas import tpu as pltpu


# ------------------------------ in-kernel helpers ------------------------------

def _layer_norm(z, g, b, eps=1e-5):
    """LayerNorm over last dim in f32 (PyTorch default eps=1e-5)."""
    mu = jnp.mean(z, axis=-1, keepdims=True)
    var = jnp.mean(jnp.square(z - mu), axis=-1, keepdims=True)
    return (z - mu) * jax.lax.rsqrt(var + eps) * g + b


def _mha(q, k, v, n_heads, causal, cdt):
    """Multi-head SDPA on VMEM-resident (L, D)/(S, D) values.

    q, k, v are f32; matmuls run with bf16 (cdt) inputs and f32 accumulation.
    Head split is a static lane slice; merge is a lane concat (all in VMEM).
    """
    L, D = q.shape
    S = k.shape[0]
    dh = D // n_heads
    q = q * (1.0 / math.sqrt(dh))          # fold scale into the smallest tensor

    if causal:
        row = jax.lax.broadcasted_iota(jnp.int32, (L, S), 0)
        col = jax.lax.broadcasted_iota(jnp.int32, (L, S), 1)
        neg = jnp.where(col <= row, 0.0, -1e30).astype(jnp.float32)

    heads = []
    for h in range(n_heads):               # static unroll, all operands in VMEM
        lo, hi = h * dh, (h + 1) * dh
        qh = q[:, lo:hi].astype(cdt)
        kh = k[:, lo:hi].astype(cdt)
        vh = v[:, lo:hi].astype(cdt)
        # q @ k^T without materializing a transpose (MXU handles transposed rhs).
        s = jax.lax.dot_general(qh, kh, (((1,), (1,)), ((), ())),
                                preferred_element_type=jnp.float32)
        if causal:
            s = s + neg
        m = jnp.max(s, axis=-1, keepdims=True)
        p = jnp.exp(s - m)
        denom = jnp.sum(p, axis=-1, keepdims=True)
        p = p * pl.reciprocal(denom, approx=True)
        heads.append(jnp.dot(p.astype(cdt), vh,
                             preferred_element_type=jnp.float32))
    return jnp.concatenate(heads, axis=-1)  # (L, D) f32


# ------------------------------ fused layer kernel ------------------------------

def _decoder_layer_kernel(
    x_ref, cross_ref,
    wqkv_s_ref, bqkv_s_ref, wo_s_ref, bo_s_ref,
    wq_c_ref, bq_c_ref, wkv_c_ref, bkv_c_ref, wo_c_ref, bo_c_ref,
    ln1_g_ref, ln1_b_ref, ln2_g_ref, ln2_b_ref, ln3_g_ref, ln3_b_ref,
    wff1_ref, bff1_ref, wff2_ref, bff2_ref,
    o_ref,
    *, n_heads, causal_self, compute_dtype):
    cdt = compute_dtype
    D = x_ref.shape[-1]

    x = x_ref[0].astype(jnp.float32)        # (L, D)
    c = cross_ref[0].astype(jnp.float32)    # (S, D)

    # ---------------- self-attention (fused QKV) + residual + norm1 ----------------
    qkv = jnp.dot(x.astype(cdt), wqkv_s_ref[...].astype(cdt),
                  preferred_element_type=jnp.float32) + bqkv_s_ref[...]
    q, k, v = qkv[:, :D], qkv[:, D:2 * D], qkv[:, 2 * D:]
    a = _mha(q, k, v, n_heads, causal_self, cdt)
    a = jnp.dot(a.astype(cdt), wo_s_ref[...].astype(cdt),
                preferred_element_type=jnp.float32) + bo_s_ref[...]
    x = _layer_norm(x + a, ln1_g_ref[...], ln1_b_ref[...])

    # ---------------- cross-attention (fused KV) + residual + norm2 ----------------
    q = jnp.dot(x.astype(cdt), wq_c_ref[...].astype(cdt),
                preferred_element_type=jnp.float32) + bq_c_ref[...]
    kv = jnp.dot(c.astype(cdt), wkv_c_ref[...].astype(cdt),
                 preferred_element_type=jnp.float32) + bkv_c_ref[...]
    k, v = kv[:, :D], kv[:, D:]
    a = _mha(q, k, v, n_heads, False, cdt)
    a = jnp.dot(a.astype(cdt), wo_c_ref[...].astype(cdt),
                preferred_element_type=jnp.float32) + bo_c_ref[...]
    x = _layer_norm(x + a, ln2_g_ref[...], ln2_b_ref[...])

    # -------- position-wise FFN (Conv1d k=1 == per-position linear) + norm3 --------
    h = jnp.dot(x.astype(cdt), wff1_ref[...].astype(cdt),
                preferred_element_type=jnp.float32) + bff1_ref[...]
    h = jnp.maximum(h, 0.0)
    y = jnp.dot(h.astype(cdt), wff2_ref[...].astype(cdt),
                preferred_element_type=jnp.float32) + bff2_ref[...]
    out = _layer_norm(x + y, ln3_g_ref[...], ln3_b_ref[...])

    o_ref[0] = out.astype(o_ref.dtype)


# ------------------------------ wrapper ------------------------------

def decoder_layer_forward(x, cross, params, *, n_heads, causal_self=True,
                          compute_dtype=jnp.bfloat16):
    """Mirrors DecoderLayer.forward (dropout = identity / eval mode)."""
    B, L, D = x.shape
    S = cross.shape[1]
    p = params

    weight_args = (
        p["wqkv_s"], p["bqkv_s"], p["wo_s"], p["bo_s"],
        p["wq_c"], p["bq_c"], p["wkv_c"], p["bkv_c"], p["wo_c"], p["bo_c"],
        p["ln1_g"], p["ln1_b"], p["ln2_g"], p["ln2_b"], p["ln3_g"], p["ln3_b"],
        p["w_ff1"], p["b_ff1"], p["w_ff2"], p["b_ff2"],
    )

    def _bcast_spec(arr):
        nd = arr.ndim
        return pl.BlockSpec(arr.shape, lambda b, _n=nd: (0,) * _n)

    kernel = functools.partial(
        _decoder_layer_kernel, n_heads=n_heads,
        causal_self=causal_self, compute_dtype=compute_dtype)

    return pl.pallas_call(
        kernel,
        out_shape=jax.ShapeDtypeStruct((B, L, D), x.dtype),
        grid=(B,),
        in_specs=[
            pl.BlockSpec((1, L, D), lambda b: (b, 0, 0)),
            pl.BlockSpec((1, S, D), lambda b: (b, 0, 0)),
            *[_bcast_spec(w) for w in weight_args],
        ],
        out_specs=pl.BlockSpec((1, L, D), lambda b: (b, 0, 0)),
        compiler_params=pltpu.CompilerParams(
            dimension_semantics=("parallel",),      # shards batch over v7x's 2 TCs
            vmem_limit_bytes=32 * 1024 * 1024,      # safe on v5e/v6e/v7x
        ),
    )(x, cross, *weight_args)


# ------------------------------ params / reference ------------------------------

def init_params(key, d_model, d_ff, n_heads, param_dtype=jnp.bfloat16):
    ks = jax.random.split(key, 8)
    s = 0.02
    D, F = d_model, d_ff

    def w(k, shape):
        return (s * jax.random.normal(k, shape, dtype=jnp.float32)).astype(param_dtype)

    def zeros(shape):
        return jnp.zeros(shape, jnp.float32)

    return {
        # self-attention: fused QKV projection
        "wqkv_s": w(ks[0], (D, 3 * D)), "bqkv_s": zeros((1, 3 * D)),
        "wo_s": w(ks[1], (D, D)), "bo_s": zeros((1, D)),
        # cross-attention: Q from decoder stream, fused KV from encoder stream
        "wq_c": w(ks[2], (D, D)), "bq_c": zeros((1, D)),
        "wkv_c": w(ks[3], (D, 2 * D)), "bkv_c": zeros((1, 2 * D)),
        "wo_c": w(ks[4], (D, D)), "bo_c": zeros((1, D)),
        # layer norms
        "ln1_g": jnp.ones((1, D), jnp.float32), "ln1_b": zeros((1, D)),
        "ln2_g": jnp.ones((1, D), jnp.float32), "ln2_b": zeros((1, D)),
        "ln3_g": jnp.ones((1, D), jnp.float32), "ln3_b": zeros((1, D)),
        # FFN (Conv1d kernel_size=1 == per-position linear)
        "w_ff1": w(ks[5], (D, F)), "b_ff1": zeros((1, F)),
        "w_ff2": w(ks[6], (F, D)), "b_ff2": zeros((1, D)),
    }


def _reference_forward(x, cross, p, n_heads, causal_self=True):
    """Pure-JAX f32 reference for a sanity check."""
    D = x.shape[-1]
    f = lambda a: a.astype(jnp.float32)

    def ln(z, g, b):
        mu = z.mean(-1, keepdims=True)
        var = ((z - mu) ** 2).mean(-1, keepdims=True)
        return (z - mu) / jnp.sqrt(var + 1e-5) * g + b

    def attn(q, k, v, causal):
        B, L, _ = q.shape
        S = k.shape[1]
        dh = D // n_heads
        qh = q.reshape(B, L, n_heads, dh)
        kh = k.reshape(B, S, n_heads, dh)
        vh = v.reshape(B, S, n_heads, dh)
        s = jnp.einsum("blhd,bshd->bhls", qh, kh) / math.sqrt(dh)
        if causal:
            s = jnp.where(jnp.tril(jnp.ones((L, S), bool)), s, -1e30)
        pr = jax.nn.softmax(s, axis=-1)
        return jnp.einsum("bhls,bshd->blhd", pr, vh).reshape(B, L, D)

    qkv = x @ f(p["wqkv_s"]) + p["bqkv_s"]
    a = attn(qkv[..., :D], qkv[..., D:2 * D], qkv[..., 2 * D:], causal_self)
    x = ln(x + (a @ f(p["wo_s"]) + p["bo_s"]), p["ln1_g"], p["ln1_b"])

    q = x @ f(p["wq_c"]) + p["bq_c"]
    kv = cross @ f(p["wkv_c"]) + p["bkv_c"]
    a = attn(q, kv[..., :D], kv[..., D:], False)
    x = ln(x + (a @ f(p["wo_c"]) + p["bo_c"]), p["ln2_g"], p["ln2_b"])

    y = jnp.maximum(x @ f(p["w_ff1"]) + p["b_ff1"], 0.0)
    y = y @ f(p["w_ff2"]) + p["b_ff2"]
    return ln(x + y, p["ln3_g"], p["ln3_b"])


# ------------------------------ demo ------------------------------

if __name__ == "__main__":
    B, L, S = 2, 8, 12            # batch, decoder seq, encoder (cross) seq
    d_model, n_heads = 32, 4
    d_ff = 4 * d_model

    key = jax.random.PRNGKey(0)
    kx, kc, kp = jax.random.split(key, 3)
    x = jax.random.normal(kx, (B, L, d_model), dtype=jnp.float32)
    cross = jax.random.normal(kc, (B, S, d_model), dtype=jnp.float32)
    params = init_params(kp, d_model, d_ff, n_heads)

    fwd = jax.jit(decoder_layer_forward,
                  static_argnames=("n_heads", "causal_self", "compute_dtype"))
    out = jax.block_until_ready(
        fwd(x, cross, params, n_heads=n_heads, causal_self=True,
            compute_dtype=jnp.bfloat16))

    assert out.shape == (B, L, d_model) and out.dtype == jnp.float32
    assert bool(jnp.all(jnp.isfinite(out)))

    # Loose numerical sanity check against a pure-JAX f32 reference
    # (kernel uses bf16 matmul inputs, so allow a generous tolerance).
    ref = _reference_forward(x, cross, params, n_heads, causal_self=True)
    assert float(jnp.max(jnp.abs(out - ref))) < 0.1

    print("KERNEL_OK")
</pallas_src>

<mosaic_0001>
module attributes {stable_mosaic.version = 11 : i64} {
  func.func @_decoder_layer_kernel(%arg0: i32, %arg1: memref<1x8x32xf32, #tpu.memory_space<vmem>>, %arg2: memref<1x12x32xf32, #tpu.memory_space<vmem>>, %arg3: memref<32x96xbf16, #tpu.memory_space<vmem>>, %arg4: memref<1x96xf32, #tpu.memory_space<vmem>>, %arg5: memref<32x32xbf16, #tpu.memory_space<vmem>>, %arg6: memref<1x32xf32, #tpu.memory_space<vmem>>, %arg7: memref<32x32xbf16, #tpu.memory_space<vmem>>, %arg8: memref<1x32xf32, #tpu.memory_space<vmem>>, %arg9: memref<32x64xbf16, #tpu.memory_space<vmem>>, %arg10: memref<1x64xf32, #tpu.memory_space<vmem>>, %arg11: memref<32x32xbf16, #tpu.memory_space<vmem>>, %arg12: memref<1x32xf32, #tpu.memory_space<vmem>>, %arg13: memref<1x32xf32, #tpu.memory_space<vmem>>, %arg14: memref<1x32xf32, #tpu.memory_space<vmem>>, %arg15: memref<1x32xf32, #tpu.memory_space<vmem>>, %arg16: memref<1x32xf32, #tpu.memory_space<vmem>>, %arg17: memref<1x32xf32, #tpu.memory_space<vmem>>, %arg18: memref<1x32xf32, #tpu.memory_space<vmem>>, %arg19: memref<32x128xbf16, #tpu.memory_space<vmem>>, %arg20: memref<1x128xf32, #tpu.memory_space<vmem>>, %arg21: memref<128x32xbf16, #tpu.memory_space<vmem>>, %arg22: memref<1x32xf32, #tpu.memory_space<vmem>>, %arg23: memref<1x8x32xf32, #tpu.memory_space<vmem>>) attributes {dimension_semantics = [#tpu.dimension_semantics<parallel>], iteration_bounds = array<i64: 2>, scalar_prefetch = 0 : i64, scratch_operands = 0 : i64, tpu.core_type = #tpu.core_type<tc>, window_params = [{transform_indices = @transform_0, window_bounds = array<i64: 1, 8, 32>}, {transform_indices = @transform_1, window_bounds = array<i64: 1, 12, 32>}, {pipeline_mode = #tpu.pipeline_mode<synchronous>, transform_indices = @transform_2, window_bounds = array<i64: 32, 96>}, {pipeline_mode = #tpu.pipeline_mode<synchronous>, transform_indices = @transform_3, window_bounds = array<i64: 1, 96>}, {pipeline_mode = #tpu.pipeline_mode<synchronous>, transform_indices = @transform_4, window_bounds = array<i64: 32, 32>}, {pipeline_mode = #tpu.pipeline_mode<synchronous>, transform_indices = @transform_5, window_bounds = array<i64: 1, 32>}, {pipeline_mode = #tpu.pipeline_mode<synchronous>, transform_indices = @transform_6, window_bounds = array<i64: 32, 32>}, {pipeline_mode = #tpu.pipeline_mode<synchronous>, transform_indices = @transform_7, window_bounds = array<i64: 1, 32>}, {pipeline_mode = #tpu.pipeline_mode<synchronous>, transform_indices = @transform_8, window_bounds = array<i64: 32, 64>}, {pipeline_mode = #tpu.pipeline_mode<synchronous>, transform_indices = @transform_9, window_bounds = array<i64: 1, 64>}, {pipeline_mode = #tpu.pipeline_mode<synchronous>, transform_indices = @transform_10, window_bounds = array<i64: 32, 32>}, {pipeline_mode = #tpu.pipeline_mode<synchronous>, transform_indices = @transform_11, window_bounds = array<i64: 1, 32>}, {pipeline_mode = #tpu.pipeline_mode<synchronous>, transform_indices = @transform_12, window_bounds = array<i64: 1, 32>}, {pipeline_mode = #tpu.pipeline_mode<synchronous>, transform_indices = @transform_13, window_bounds = array<i64: 1, 32>}, {pipeline_mode = #tpu.pipeline_mode<synchronous>, transform_indices = @transform_14, window_bounds = array<i64: 1, 32>}, {pipeline_mode = #tpu.pipeline_mode<synchronous>, transform_indices = @transform_15, window_bounds = array<i64: 1, 32>}, {pipeline_mode = #tpu.pipeline_mode<synchronous>, transform_indices = @transform_16, window_bounds = array<i64: 1, 32>}, {pipeline_mode = #tpu.pipeline_mode<synchronous>, transform_indices = @transform_17, window_bounds = array<i64: 1, 32>}, {pipeline_mode = #tpu.pipeline_mode<synchronous>, transform_indices = @transform_18, window_bounds = array<i64: 32, 128>}, {pipeline_mode = #tpu.pipeline_mode<synchronous>, transform_indices = @transform_19, window_bounds = array<i64: 1, 128>}, {pipeline_mode = #tpu.pipeline_mode<synchronous>, transform_indices = @transform_20, window_bounds = array<i64: 128, 32>}, {pipeline_mode = #tpu.pipeline_mode<synchronous>, transform_indices = @transform_21, window_bounds = array<i64: 1, 32>}, {transform_indices = @transform_22, window_bounds = array<i64: 1, 8, 32>}]} {
    %c0 = arith.constant 0 : index
    %c0_0 = arith.constant 0 : index
    %c0_1 = arith.constant 0 : index
    %0 = vector.load %arg1[%c0, %c0_0, %c0_1] : memref<1x8x32xf32, #tpu.memory_space<vmem>>, vector<1x8x32xf32>
    %1 = vector.shape_cast %0 : vector<1x8x32xf32> to vector<8x32xf32>
    %c0_2 = arith.constant 0 : index
    %c0_3 = arith.constant 0 : index
    %c0_4 = arith.constant 0 : index
    %2 = vector.load %arg2[%c0_2, %c0_3, %c0_4] : memref<1x12x32xf32, #tpu.memory_space<vmem>>, vector<1x12x32xf32>
    %3 = vector.shape_cast %2 : vector<1x12x32xf32> to vector<12x32xf32>
    %4 = arith.truncf %1 : vector<8x32xf32> to vector<8x32xbf16>
    %c0_5 = arith.constant 0 : index
    %c0_6 = arith.constant 0 : index
    %5 = vector.load %arg3[%c0_5, %c0_6] : memref<32x96xbf16, #tpu.memory_space<vmem>>, vector<32x96xbf16>
    %cst = arith.constant dense<0.000000e+00> : vector<8x96xf32>
    %6 = tpu.matmul %4, %5, %cst {dimension_numbers = #tpu.dot_dimension_numbers<[1], [0], [0], [1], [0, 0, 1, 1], [], []>} : vector<8x32xbf16>, vector<32x96xbf16>, vector<8x96xf32> -> vector<8x96xf32>
    %c0_7 = arith.constant 0 : index
    %c0_8 = arith.constant 0 : index
    %7 = vector.load %arg4[%c0_7, %c0_8] : memref<1x96xf32, #tpu.memory_space<vmem>>, vector<1x96xf32>
    %8 = vector.broadcast %7 : vector<1x96xf32> to vector<8x96xf32>
    %9 = arith.addf %6, %8 : vector<8x96xf32>
    %10 = vector.extract_strided_slice %9 {offsets = [0, 0], sizes = [8, 32], strides = [1, 1]} : vector<8x96xf32> to vector<8x32xf32>
    %11 = vector.extract_strided_slice %9 {offsets = [0, 32], sizes = [8, 32], strides = [1, 1]} : vector<8x96xf32> to vector<8x32xf32>
    %12 = vector.extract_strided_slice %9 {offsets = [0, 64], sizes = [8, 32], strides = [1, 1]} : vector<8x96xf32> to vector<8x32xf32>
    %cst_9 = arith.constant 0.353553385 : f32
    %13 = vector.broadcast %cst_9 : f32 to vector<8x32xf32>
    %14 = arith.mulf %10, %13 : vector<8x32xf32>
    %15 = tpu.iota {dimensions = array<i32: 0>} : vector<8x8xi32>
    %16 = tpu.iota {dimensions = array<i32: 1>} : vector<8x8xi32>
    %17 = arith.cmpi sle, %16, %15 : vector<8x8xi32>
    %cst_10 = arith.constant 0.000000e+00 : f32
    %cst_11 = arith.constant -1.000000e+30 : f32
    %18 = vector.broadcast %cst_10 : f32 to vector<8x8xf32>
    %19 = vector.broadcast %cst_11 : f32 to vector<8x8xf32>
    %20 = arith.select %17, %18, %19 : vector<8x8xi1>, vector<8x8xf32>
    %21 = vector.extract_strided_slice %14 {offsets = [0, 0], sizes = [8, 8], strides = [1, 1]} : vector<8x32xf32> to vector<8x8xf32>
    %22 = arith.truncf %21 : vector<8x8xf32> to vector<8x8xbf16>
    %23 = vector.extract_strided_slice %11 {offsets = [0, 0], sizes = [8, 8], strides = [1, 1]} : vector<8x32xf32> to vector<8x8xf32>
    %24 = arith.truncf %23 : vector<8x8xf32> to vector<8x8xbf16>
    %25 = vector.extract_strided_slice %12 {offsets = [0, 0], sizes = [8, 8], strides = [1, 1]} : vector<8x32xf32> to vector<8x8xf32>
    %26 = arith.truncf %25 : vector<8x8xf32> to vector<8x8xbf16>
    %cst_12 = arith.constant dense<0.000000e+00> : vector<8x8xf32>
    %27 = tpu.matmul %22, %24, %cst_12 {dimension_numbers = #tpu.dot_dimension_numbers<[1], [1], [0], [0], [0, 0, 1, 0], [], []>} : vector<8x8xbf16>, vector<8x8xbf16>, vector<8x8xf32> -> vector<8x8xf32>
    %28 = arith.addf %27, %20 : vector<8x8xf32>
    %cst_13 = arith.constant dense<0xFF800000> : vector<8xf32>
    %29 = vector.multi_reduction <maximumf>, %28, %cst_13 [1] : vector<8x8xf32> to vector<8xf32>
    %30 = vector.shape_cast %29 : vector<8xf32> to vector<8x1xf32>
    %31 = vector.broadcast %30 : vector<8x1xf32> to vector<8x8xf32>
    %32 = arith.subf %28, %31 : vector<8x8xf32>
    %33 = math.exp %32 : vector<8x8xf32>
    %cst_14 = arith.constant dense<0.000000e+00> : vector<8xf32>
    %34 = vector.multi_reduction <add>, %33, %cst_14 [1] : vector<8x8xf32> to vector<8xf32>
    %35 = vector.shape_cast %34 : vector<8xf32> to vector<8x1xf32>
    %36 = tpu.reciprocal %35 {approx = true} : vector<8x1xf32> -> vector<8x1xf32>
    %37 = vector.broadcast %36 : vector<8x1xf32> to vector<8x8xf32>
    %38 = arith.mulf %33, %37 : vector<8x8xf32>
    %39 = arith.truncf %38 : vector<8x8xf32> to vector<8x8xbf16>
    %cst_15 = arith.constant dense<0.000000e+00> : vector<8x8xf32>
    %40 = tpu.matmul %39, %26, %cst_15 {dimension_numbers = #tpu.dot_dimension_numbers<[1], [0], [0], [1], [0, 0, 1, 1], [], []>} : vector<8x8xbf16>, vector<8x8xbf16>, vector<8x8xf32> -> vector<8x8xf32>
    %41 = vector.extract_strided_slice %14 {offsets = [0, 8], sizes = [8, 8], strides = [1, 1]} : vector<8x32xf32> to vector<8x8xf32>
    %42 = arith.truncf %41 : vector<8x8xf32> to vector<8x8xbf16>
    %43 = vector.extract_strided_slice %11 {offsets = [0, 8], sizes = [8, 8], strides = [1, 1]} : vector<8x32xf32> to vector<8x8xf32>
    %44 = arith.truncf %43 : vector<8x8xf32> to vector<8x8xbf16>
    %45 = vector.extract_strided_slice %12 {offsets = [0, 8], sizes = [8, 8], strides = [1, 1]} : vector<8x32xf32> to vector<8x8xf32>
    %46 = arith.truncf %45 : vector<8x8xf32> to vector<8x8xbf16>
    %cst_16 = arith.constant dense<0.000000e+00> : vector<8x8xf32>
    %47 = tpu.matmul %42, %44, %cst_16 {dimension_numbers = #tpu.dot_dimension_numbers<[1], [1], [0], [0], [0, 0, 1, 0], [], []>} : vector<8x8xbf16>, vector<8x8xbf16>, vector<8x8xf32> -> vector<8x8xf32>
    %48 = arith.addf %47, %20 : vector<8x8xf32>
    %cst_17 = arith.constant dense<0xFF800000> : vector<8xf32>
    %49 = vector.multi_reduction <maximumf>, %48, %cst_17 [1] : vector<8x8xf32> to vector<8xf32>
    %50 = vector.shape_cast %49 : vector<8xf32> to vector<8x1xf32>
    %51 = vector.broadcast %50 : vector<8x1xf32> to vector<8x8xf32>
    %52 = arith.subf %48, %51 : vector<8x8xf32>
    %53 = math.exp %52 : vector<8x8xf32>
    %cst_18 = arith.constant dense<0.000000e+00> : vector<8xf32>
    %54 = vector.multi_reduction <add>, %53, %cst_18 [1] : vector<8x8xf32> to vector<8xf32>
    %55 = vector.shape_cast %54 : vector<8xf32> to vector<8x1xf32>
    %56 = tpu.reciprocal %55 {approx = true} : vector<8x1xf32> -> vector<8x1xf32>
    %57 = vector.broadcast %56 : vector<8x1xf32> to vector<8x8xf32>
    %58 = arith.mulf %53, %57 : vector<8x8xf32>
    %59 = arith.truncf %58 : vector<8x8xf32> to vector<8x8xbf16>
    %cst_19 = arith.constant dense<0.000000e+00> : vector<8x8xf32>
    %60 = tpu.matmul %59, %46, %cst_19 {dimension_numbers = #tpu.dot_dimension_numbers<[1], [0], [0], [1], [0, 0, 1, 1], [], []>} : vector<8x8xbf16>, vector<8x8xbf16>, vector<8x8xf32> -> vector<8x8xf32>
    %61 = vector.extract_strided_slice %14 {offsets = [0, 16], sizes = [8, 8], strides = [1, 1]} : vector<8x32xf32> to vector<8x8xf32>
    %62 = arith.truncf %61 : vector<8x8xf32> to vector<8x8xbf16>
    %63 = vector.extract_strided_slice %11 {offsets = [0, 16], sizes = [8, 8], strides = [1, 1]} : vector<8x32xf32> to vector<8x8xf32>
    %64 = arith.truncf %63 : vector<8x8xf32> to vector<8x8xbf16>
    %65 = vector.extract_strided_slice %12 {offsets = [0, 16], sizes = [8, 8], strides = [1, 1]} : vector<8x32xf32> to vector<8x8xf32>
    %66 = arith.truncf %65 : vector<8x8xf32> to vector<8x8xbf16>
    %cst_20 = arith.constant dense<0.000000e+00> : vector<8x8xf32>
    %67 = tpu.matmul %62, %64, %cst_20 {dimension_numbers = #tpu.dot_dimension_numbers<[1], [1], [0], [0], [0, 0, 1, 0], [], []>} : vector<8x8xbf16>, vector<8x8xbf16>, vector<8x8xf32> -> vector<8x8xf32>
    %68 = arith.addf %67, %20 : vector<8x8xf32>
    %cst_21 = arith.constant dense<0xFF800000> : vector<8xf32>
    %69 = vector.multi_reduction <maximumf>, %68, %cst_21 [1] : vector<8x8xf32> to vector<8xf32>
    %70 = vector.shape_cast %69 : vector<8xf32> to vector<8x1xf32>
    %71 = vector.broadcast %70 : vector<8x1xf32> to vector<8x8xf32>
    %72 = arith.subf %68, %71 : vector<8x8xf32>
    %73 = math.exp %72 : vector<8x8xf32>
    %cst_22 = arith.constant dense<0.000000e+00> : vector<8xf32>
    %74 = vector.multi_reduction <add>, %73, %cst_22 [1] : vector<8x8xf32> to vector<8xf32>
    %75 = vector.shape_cast %74 : vector<8xf32> to vector<8x1xf32>
    %76 = tpu.reciprocal %75 {approx = true} : vector<8x1xf32> -> vector<8x1xf32>
    %77 = vector.broadcast %76 : vector<8x1xf32> to vector<8x8xf32>
    %78 = arith.mulf %73, %77 : vector<8x8xf32>
    %79 = arith.truncf %78 : vector<8x8xf32> to vector<8x8xbf16>
    %cst_23 = arith.constant dense<0.000000e+00> : vector<8x8xf32>
    %80 = tpu.matmul %79, %66, %cst_23 {dimension_numbers = #tpu.dot_dimension_numbers<[1], [0], [0], [1], [0, 0, 1, 1], [], []>} : vector<8x8xbf16>, vector<8x8xbf16>, vector<8x8xf32> -> vector<8x8xf32>
    %81 = vector.extract_strided_slice %14 {offsets = [0, 24], sizes = [8, 8], strides = [1, 1]} : vector<8x32xf32> to vector<8x8xf32>
    %82 = arith.truncf %81 : vector<8x8xf32> to vector<8x8xbf16>
    %83 = vector.extract_strided_slice %11 {offsets = [0, 24], sizes = [8, 8], strides = [1, 1]} : vector<8x32xf32> to vector<8x8xf32>
    %84 = arith.truncf %83 : vector<8x8xf32> to vector<8x8xbf16>
    %85 = vector.extract_strided_slice %12 {offsets = [0, 24], sizes = [8, 8], strides = [1, 1]} : vector<8x32xf32> to vector<8x8xf32>
    %86 = arith.truncf %85 : vector<8x8xf32> to vector<8x8xbf16>
    %cst_24 = arith.constant dense<0.000000e+00> : vector<8x8xf32>
    %87 = tpu.matmul %82, %84, %cst_24 {dimension_numbers = #tpu.dot_dimension_numbers<[1], [1], [0], [0], [0, 0, 1, 0], [], []>} : vector<8x8xbf16>, vector<8x8xbf16>, vector<8x8xf32> -> vector<8x8xf32>
    %88 = arith.addf %87, %20 : vector<8x8xf32>
    %cst_25 = arith.constant dense<0xFF800000> : vector<8xf32>
    %89 = vector.multi_reduction <maximumf>, %88, %cst_25 [1] : vector<8x8xf32> to vector<8xf32>
    %90 = vector.shape_cast %89 : vector<8xf32> to vector<8x1xf32>
    %91 = vector.broadcast %90 : vector<8x1xf32> to vector<8x8xf32>
    %92 = arith.subf %88, %91 : vector<8x8xf32>
    %93 = math.exp %92 : vector<8x8xf32>
    %cst_26 = arith.constant dense<0.000000e+00> : vector<8xf32>
    %94 = vector.multi_reduction <add>, %93, %cst_26 [1] : vector<8x8xf32> to vector<8xf32>
    %95 = vector.shape_cast %94 : vector<8xf32> to vector<8x1xf32>
    %96 = tpu.reciprocal %95 {approx = true} : vector<8x1xf32> -> vector<8x1xf32>
    %97 = vector.broadcast %96 : vector<8x1xf32> to vector<8x8xf32>
    %98 = arith.mulf %93, %97 : vector<8x8xf32>
    %99 = arith.truncf %98 : vector<8x8xf32> to vector<8x8xbf16>
    %cst_27 = arith.constant dense<0.000000e+00> : vector<8x8xf32>
    %100 = tpu.matmul %99, %86, %cst_27 {dimension_numbers = #tpu.dot_dimension_numbers<[1], [0], [0], [1], [0, 0, 1, 1], [], []>} : vector<8x8xbf16>, vector<8x8xbf16>, vector<8x8xf32> -> vector<8x8xf32>
    %101 = tpu.concatenate %40, %60, %80, %100 in 1 : vector<8x8xf32>, vector<8x8xf32>, vector<8x8xf32>, vector<8x8xf32> -> vector<8x32xf32>
    %102 = arith.truncf %101 : vector<8x32xf32> to vector<8x32xbf16>
    %c0_28 = arith.constant 0 : index
    %c0_29 = arith.constant 0 : index
    %103 = vector.load %arg5[%c0_28, %c0_29] : memref<32x32xbf16, #tpu.memory_space<vmem>>, vector<32x32xbf16>
    %cst_30 = arith.constant dense<0.000000e+00> : vector<8x32xf32>
    %104 = tpu.matmul %102, %103, %cst_30 {dimension_numbers = #tpu.dot_dimension_numbers<[1], [0], [0], [1], [0, 0, 1, 1], [], []>} : vector<8x32xbf16>, vector<32x32xbf16>, vector<8x32xf32> -> vector<8x32xf32>
    %c0_31 = arith.constant 0 : index
    %c0_32 = arith.constant 0 : index
    %105 = vector.load %arg6[%c0_31, %c0_32] : memref<1x32xf32, #tpu.memory_space<vmem>>, vector<1x32xf32>
    %106 = vector.broadcast %105 : vector<1x32xf32> to vector<8x32xf32>
    %107 = arith.addf %104, %106 : vector<8x32xf32>
    %108 = arith.addf %1, %107 : vector<8x32xf32>
    %c0_33 = arith.constant 0 : index
    %c0_34 = arith.constant 0 : index
    %109 = vector.load %arg13[%c0_33, %c0_34] : memref<1x32xf32, #tpu.memory_space<vmem>>, vector<1x32xf32>
    %c0_35 = arith.constant 0 : index
    %c0_36 = arith.constant 0 : index
    %110 = vector.load %arg14[%c0_35, %c0_36] : memref<1x32xf32, #tpu.memory_space<vmem>>, vector<1x32xf32>
    %cst_37 = arith.constant dense<0.000000e+00> : vector<8xf32>
    %111 = vector.multi_reduction <add>, %108, %cst_37 [1] : vector<8x32xf32> to vector<8xf32>
    %112 = vector.shape_cast %111 : vector<8xf32> to vector<8x1xf32>
    %cst_38 = arith.constant 3.200000e+01 : f32
    %113 = vector.broadcast %cst_38 : f32 to vector<8x1xf32>
    %114 = arith.divf %112, %113 : vector<8x1xf32>
    %115 = vector.broadcast %114 : vector<8x1xf32> to vector<8x32xf32>
    %116 = arith.subf %108, %115 : vector<8x32xf32>
    %117 = arith.mulf %116, %116 : vector<8x32xf32>
    %cst_39 = arith.constant dense<0.000000e+00> : vector<8xf32>
    %118 = vector.multi_reduction <add>, %117, %cst_39 [1] : vector<8x32xf32> to vector<8xf32>
    %119 = vector.shape_cast %118 : vector<8xf32> to vector<8x1xf32>
    %cst_40 = arith.constant 3.200000e+01 : f32
    %120 = vector.broadcast %cst_40 : f32 to vector<8x1xf32>
    %121 = arith.divf %119, %120 : vector<8x1xf32>
    %122 = vector.broadcast %114 : vector<8x1xf32> to vector<8x32xf32>
    %123 = arith.subf %108, %122 : vector<8x32xf32>
    %cst_41 = arith.constant 9.99999974E-6 : f32
    %124 = vector.broadcast %cst_41 : f32 to vector<8x1xf32>
    %125 = arith.addf %121, %124 : vector<8x1xf32>
    %126 = math.rsqrt %125 : vector<8x1xf32>
    %127 = vector.broadcast %126 : vector<8x1xf32> to vector<8x32xf32>
    %128 = arith.mulf %123, %127 : vector<8x32xf32>
    %129 = vector.broadcast %109 : vector<1x32xf32> to vector<8x32xf32>
    %130 = arith.mulf %128, %129 : vector<8x32xf32>
    %131 = vector.broadcast %110 : vector<1x32xf32> to vector<8x32xf32>
    %132 = arith.addf %130, %131 : vector<8x32xf32>
    %133 = arith.truncf %132 : vector<8x32xf32> to vector<8x32xbf16>
    %c0_42 = arith.constant 0 : index
    %c0_43 = arith.constant 0 : index
    %134 = vector.load %arg7[%c0_42, %c0_43] : memref<32x32xbf16, #tpu.memory_space<vmem>>, vector<32x32xbf16>
    %cst_44 = arith.constant dense<0.000000e+00> : vector<8x32xf32>
    %135 = tpu.matmul %133, %134, %cst_44 {dimension_numbers = #tpu.dot_dimension_numbers<[1], [0], [0], [1], [0, 0, 1, 1], [], []>} : vector<8x32xbf16>, vector<32x32xbf16>, vector<8x32xf32> -> vector<8x32xf32>
    %c0_45 = arith.constant 0 : index
    %c0_46 = arith.constant 0 : index
    %136 = vector.load %arg8[%c0_45, %c0_46] : memref<1x32xf32, #tpu.memory_space<vmem>>, vector<1x32xf32>
    %137 = vector.broadcast %136 : vector<1x32xf32> to vector<8x32xf32>
    %138 = arith.addf %135, %137 : vector<8x32xf32>
    %139 = arith.truncf %3 : vector<12x32xf32> to vector<12x32xbf16>
    %c0_47 = arith.constant 0 : index
    %c0_48 = arith.constant 0 : index
    %140 = vector.load %arg9[%c0_47, %c0_48] : memref<32x64xbf16, #tpu.memory_space<vmem>>, vector<32x64xbf16>
    %cst_49 = arith.constant dense<0.000000e+00> : vector<12x64xf32>
    %141 = tpu.matmul %139, %140, %cst_49 {dimension_numbers = #tpu.dot_dimension_numbers<[1], [0], [0], [1], [0, 0, 1, 1], [], []>} : vector<12x32xbf16>, vector<32x64xbf16>, vector<12x64xf32> -> vector<12x64xf32>
    %c0_50 = arith.constant 0 : index
    %c0_51 = arith.constant 0 : index
    %142 = vector.load %arg10[%c0_50, %c0_51] : memref<1x64xf32, #tpu.memory_space<vmem>>, vector<1x64xf32>
    %143 = vector.broadcast %142 : vector<1x64xf32> to vector<12x64xf32>
    %144 = arith.addf %141, %143 : vector<12x64xf32>
    %145 = vector.extract_strided_slice %144 {offsets = [0, 0], sizes = [12, 32], strides = [1, 1]} : vector<12x64xf32> to vector<12x32xf32>
    %146 = vector.extract_strided_slice %144 {offsets = [0, 32], sizes = [12, 32], strides = [1, 1]} : vector<12x64xf32> to vector<12x32xf32>
    %cst_52 = arith.constant 0.353553385 : f32
    %147 = vector.broadcast %cst_52 : f32 to vector<8x32xf32>
    %148 = arith.mulf %138, %147 : vector<8x32xf32>
    %149 = vector.extract_strided_slice %148 {offsets = [0, 0], sizes = [8, 8], strides = [1, 1]} : vector<8x32xf32> to vector<8x8xf32>
    %150 = arith.truncf %149 : vector<8x8xf32> to vector<8x8xbf16>
    %151 = vector.extract_strided_slice %145 {offsets = [0, 0], sizes = [12, 8], strides = [1, 1]} : vector<12x32xf32> to vector<12x8xf32>
    %152 = arith.truncf %151 : vector<12x8xf32> to vector<12x8xbf16>
    %153 = vector.extract_strided_slice %146 {offsets = [0, 0], sizes = [12, 8], strides = [1, 1]} : vector<12x32xf32> to vector<12x8xf32>
    %154 = arith.truncf %153 : vector<12x8xf32> to vector<12x8xbf16>
    %cst_53 = arith.constant dense<0.000000e+00> : vector<8x12xf32>
    %155 = tpu.matmul %150, %152, %cst_53 {dimension_numbers = #tpu.dot_dimension_numbers<[1], [1], [0], [0], [0, 0, 1, 0], [], []>} : vector<8x8xbf16>, vector<12x8xbf16>, vector<8x12xf32> -> vector<8x12xf32>
    %cst_54 = arith.constant dense<0xFF800000> : vector<8xf32>
    %156 = vector.multi_reduction <maximumf>, %155, %cst_54 [1] : vector<8x12xf32> to vector<8xf32>
    %157 = vector.shape_cast %156 : vector<8xf32> to vector<8x1xf32>
    %158 = vector.broadcast %157 : vector<8x1xf32> to vector<8x12xf32>
    %159 = arith.subf %155, %158 : vector<8x12xf32>
    %160 = math.exp %159 : vector<8x12xf32>
    %cst_55 = arith.constant dense<0.000000e+00> : vector<8xf32>
    %161 = vector.multi_reduction <add>, %160, %cst_55 [1] : vector<8x12xf32> to vector<8xf32>
    %162 = vector.shape_cast %161 : vector<8xf32> to vector<8x1xf32>
    %163 = tpu.reciprocal %162 {approx = true} : vector<8x1xf32> -> vector<8x1xf32>
    %164 = vector.broadcast %163 : vector<8x1xf32> to vector<8x12xf32>
    %165 = arith.mulf %160, %164 : vector<8x12xf32>
    %166 = arith.truncf %165 : vector<8x12xf32> to vector<8x12xbf16>
    %cst_56 = arith.constant dense<0.000000e+00> : vector<8x8xf32>
    %167 = tpu.matmul %166, %154, %cst_56 {dimension_numbers = #tpu.dot_dimension_numbers<[1], [0], [0], [1], [0, 0, 1, 1], [], []>} : vector<8x12xbf16>, vector<12x8xbf16>, vector<8x8xf32> -> vector<8x8xf32>
    %168 = vector.extract_strided_slice %148 {offsets = [0, 8], sizes = [8, 8], strides = [1, 1]} : vector<8x32xf32> to vector<8x8xf32>
    %169 = arith.truncf %168 : vector<8x8xf32> to vector<8x8xbf16>
    %170 = vector.extract_strided_slice %145 {offsets = [0, 8], sizes = [12, 8], strides = [1, 1]} : vector<12x32xf32> to vector<12x8xf32>
    %171 = arith.truncf %170 : vector<12x8xf32> to vector<12x8xbf16>
    %172 = vector.extract_strided_slice %146 {offsets = [0, 8], sizes = [12, 8], strides = [1, 1]} : vector<12x32xf32> to vector<12x8xf32>
    %173 = arith.truncf %172 : vector<12x8xf32> to vector<12x8xbf16>
    %cst_57 = arith.constant dense<0.000000e+00> : vector<8x12xf32>
    %174 = tpu.matmul %169, %171, %cst_57 {dimension_numbers = #tpu.dot_dimension_numbers<[1], [1], [0], [0], [0, 0, 1, 0], [], []>} : vector<8x8xbf16>, vector<12x8xbf16>, vector<8x12xf32> -> vector<8x12xf32>
    %cst_58 = arith.constant dense<0xFF800000> : vector<8xf32>
    %175 = vector.multi_reduction <maximumf>, %174, %cst_58 [1] : vector<8x12xf32> to vector<8xf32>
    %176 = vector.shape_cast %175 : vector<8xf32> to vector<8x1xf32>
    %177 = vector.broadcast %176 : vector<8x1xf32> to vector<8x12xf32>
    %178 = arith.subf %174, %177 : vector<8x12xf32>
    %179 = math.exp %178 : vector<8x12xf32>
    %cst_59 = arith.constant dense<0.000000e+00> : vector<8xf32>
    %180 = vector.multi_reduction <add>, %179, %cst_59 [1] : vector<8x12xf32> to vector<8xf32>
    %181 = vector.shape_cast %180 : vector<8xf32> to vector<8x1xf32>
    %182 = tpu.reciprocal %181 {approx = true} : vector<8x1xf32> -> vector<8x1xf32>
    %183 = vector.broadcast %182 : vector<8x1xf32> to vector<8x12xf32>
    %184 = arith.mulf %179, %183 : vector<8x12xf32>
    %185 = arith.truncf %184 : vector<8x12xf32> to vector<8x12xbf16>
    %cst_60 = arith.constant dense<0.000000e+00> : vector<8x8xf32>
    %186 = tpu.matmul %185, %173, %cst_60 {dimension_numbers = #tpu.dot_dimension_numbers<[1], [0], [0], [1], [0, 0, 1, 1], [], []>} : vector<8x12xbf16>, vector<12x8xbf16>, vector<8x8xf32> -> vector<8x8xf32>
    %187 = vector.extract_strided_slice %148 {offsets = [0, 16], sizes = [8, 8], strides = [1, 1]} : vector<8x32xf32> to vector<8x8xf32>
    %188 = arith.truncf %187 : vector<8x8xf32> to vector<8x8xbf16>
    %189 = vector.extract_strided_slice %145 {offsets = [0, 16], sizes = [12, 8], strides = [1, 1]} : vector<12x32xf32> to vector<12x8xf32>
    %190 = arith.truncf %189 : vector<12x8xf32> to vector<12x8xbf16>
    %191 = vector.extract_strided_slice %146 {offsets = [0, 16], sizes = [12, 8], strides = [1, 1]} : vector<12x32xf32> to vector<12x8xf32>
    %192 = arith.truncf %191 : vector<12x8xf32> to vector<12x8xbf16>
    %cst_61 = arith.constant dense<0.000000e+00> : vector<8x12xf32>
    %193 = tpu.matmul %188, %190, %cst_61 {dimension_numbers = #tpu.dot_dimension_numbers<[1], [1], [0], [0], [0, 0, 1, 0], [], []>} : vector<8x8xbf16>, vector<12x8xbf16>, vector<8x12xf32> -> vector<8x12xf32>
    %cst_62 = arith.constant dense<0xFF800000> : vector<8xf32>
    %194 = vector.multi_reduction <maximumf>, %193, %cst_62 [1] : vector<8x12xf32> to vector<8xf32>
    %195 = vector.shape_cast %194 : vector<8xf32> to vector<8x1xf32>
    %196 = vector.broadcast %195 : vector<8x1xf32> to vector<8x12xf32>
    %197 = arith.subf %193, %196 : vector<8x12xf32>
    %198 = math.exp %197 : vector<8x12xf32>
    %cst_63 = arith.constant dense<0.000000e+00> : vector<8xf32>
    %199 = vector.multi_reduction <add>, %198, %cst_63 [1] : vector<8x12xf32> to vector<8xf32>
    %200 = vector.shape_cast %199 : vector<8xf32> to vector<8x1xf32>
    %201 = tpu.reciprocal %200 {approx = true} : vector<8x1xf32> -> vector<8x1xf32>
    %202 = vector.broadcast %201 : vector<8x1xf32> to vector<8x12xf32>
    %203 = arith.mulf %198, %202 : vector<8x12xf32>
    %204 = arith.truncf %203 : vector<8x12xf32> to vector<8x12xbf16>
    %cst_64 = arith.constant dense<0.000000e+00> : vector<8x8xf32>
    %205 = tpu.matmul %204, %192, %cst_64 {dimension_numbers = #tpu.dot_dimension_numbers<[1], [0], [0], [1], [0, 0, 1, 1], [], []>} : vector<8x12xbf16>, vector<12x8xbf16>, vector<8x8xf32> -> vector<8x8xf32>
    %206 = vector.extract_strided_slice %148 {offsets = [0, 24], sizes = [8, 8], strides = [1, 1]} : vector<8x32xf32> to vector<8x8xf32>
    %207 = arith.truncf %206 : vector<8x8xf32> to vector<8x8xbf16>
    %208 = vector.extract_strided_slice %145 {offsets = [0, 24], sizes = [12, 8], strides = [1, 1]} : vector<12x32xf32> to vector<12x8xf32>
    %209 = arith.truncf %208 : vector<12x8xf32> to vector<12x8xbf16>
    %210 = vector.extract_strided_slice %146 {offsets = [0, 24], sizes = [12, 8], strides = [1, 1]} : vector<12x32xf32> to vector<12x8xf32>
    %211 = arith.truncf %210 : vector<12x8xf32> to vector<12x8xbf16>
    %cst_65 = arith.constant dense<0.000000e+00> : vector<8x12xf32>
    %212 = tpu.matmul %207, %209, %cst_65 {dimension_numbers = #tpu.dot_dimension_numbers<[1], [1], [0], [0], [0, 0, 1, 0], [], []>} : vector<8x8xbf16>, vector<12x8xbf16>, vector<8x12xf32> -> vector<8x12xf32>
    %cst_66 = arith.constant dense<0xFF800000> : vector<8xf32>
    %213 = vector.multi_reduction <maximumf>, %212, %cst_66 [1] : vector<8x12xf32> to vector<8xf32>
    %214 = vector.shape_cast %213 : vector<8xf32> to vector<8x1xf32>
    %215 = vector.broadcast %214 : vector<8x1xf32> to vector<8x12xf32>
    %216 = arith.subf %212, %215 : vector<8x12xf32>
    %217 = math.exp %216 : vector<8x12xf32>
    %cst_67 = arith.constant dense<0.000000e+00> : vector<8xf32>
    %218 = vector.multi_reduction <add>, %217, %cst_67 [1] : vector<8x12xf32> to vector<8xf32>
    %219 = vector.shape_cast %218 : vector<8xf32> to vector<8x1xf32>
    %220 = tpu.reciprocal %219 {approx = true} : vector<8x1xf32> -> vector<8x1xf32>
    %221 = vector.broadcast %220 : vector<8x1xf32> to vector<8x12xf32>
    %222 = arith.mulf %217, %221 : vector<8x12xf32>
    %223 = arith.truncf %222 : vector<8x12xf32> to vector<8x12xbf16>
    %cst_68 = arith.constant dense<0.000000e+00> : vector<8x8xf32>
    %224 = tpu.matmul %223, %211, %cst_68 {dimension_numbers = #tpu.dot_dimension_numbers<[1], [0], [0], [1], [0, 0, 1, 1], [], []>} : vector<8x12xbf16>, vector<12x8xbf16>, vector<8x8xf32> -> vector<8x8xf32>
    %225 = tpu.concatenate %167, %186, %205, %224 in 1 : vector<8x8xf32>, vector<8x8xf32>, vector<8x8xf32>, vector<8x8xf32> -> vector<8x32xf32>
    %226 = arith.truncf %225 : vector<8x32xf32> to vector<8x32xbf16>
    %c0_69 = arith.constant 0 : index
    %c0_70 = arith.constant 0 : index
    %227 = vector.load %arg11[%c0_69, %c0_70] : memref<32x32xbf16, #tpu.memory_space<vmem>>, vector<32x32xbf16>
    %cst_71 = arith.constant dense<0.000000e+00> : vector<8x32xf32>
    %228 = tpu.matmul %226, %227, %cst_71 {dimension_numbers = #tpu.dot_dimension_numbers<[1], [0], [0], [1], [0, 0, 1, 1], [], []>} : vector<8x32xbf16>, vector<32x32xbf16>, vector<8x32xf32> -> vector<8x32xf32>
    %c0_72 = arith.constant 0 : index
    %c0_73 = arith.constant 0 : index
    %229 = vector.load %arg12[%c0_72, %c0_73] : memref<1x32xf32, #tpu.memory_space<vmem>>, vector<1x32xf32>
    %230 = vector.broadcast %229 : vector<1x32xf32> to vector<8x32xf32>
    %231 = arith.addf %228, %230 : vector<8x32xf32>
    %232 = arith.addf %132, %231 : vector<8x32xf32>
    %c0_74 = arith.constant 0 : index
    %c0_75 = arith.constant 0 : index
    %233 = vector.load %arg15[%c0_74, %c0_75] : memref<1x32xf32, #tpu.memory_space<vmem>>, vector<1x32xf32>
    %c0_76 = arith.constant 0 : index
    %c0_77 = arith.constant 0 : index
    %234 = vector.load %arg16[%c0_76, %c0_77] : memref<1x32xf32, #tpu.memory_space<vmem>>, vector<1x32xf32>
    %cst_78 = arith.constant dense<0.000000e+00> : vector<8xf32>
    %235 = vector.multi_reduction <add>, %232, %cst_78 [1] : vector<8x32xf32> to vector<8xf32>
    %236 = vector.shape_cast %235 : vector<8xf32> to vector<8x1xf32>
    %cst_79 = arith.constant 3.200000e+01 : f32
    %237 = vector.broadcast %cst_79 : f32 to vector<8x1xf32>
    %238 = arith.divf %236, %237 : vector<8x1xf32>
    %239 = vector.broadcast %238 : vector<8x1xf32> to vector<8x32xf32>
    %240 = arith.subf %232, %239 : vector<8x32xf32>
    %241 = arith.mulf %240, %240 : vector<8x32xf32>
    %cst_80 = arith.constant dense<0.000000e+00> : vector<8xf32>
    %242 = vector.multi_reduction <add>, %241, %cst_80 [1] : vector<8x32xf32> to vector<8xf32>
    %243 = vector.shape_cast %242 : vector<8xf32> to vector<8x1xf32>
    %cst_81 = arith.constant 3.200000e+01 : f32
    %244 = vector.broadcast %cst_81 : f32 to vector<8x1xf32>
    %245 = arith.divf %243, %244 : vector<8x1xf32>
    %246 = vector.broadcast %238 : vector<8x1xf32> to vector<8x32xf32>
    %247 = arith.subf %232, %246 : vector<8x32xf32>
    %cst_82 = arith.constant 9.99999974E-6 : f32
    %248 = vector.broadcast %cst_82 : f32 to vector<8x1xf32>
    %249 = arith.addf %245, %248 : vector<8x1xf32>
    %250 = math.rsqrt %249 : vector<8x1xf32>
    %251 = vector.broadcast %250 : vector<8x1xf32> to vector<8x32xf32>
    %252 = arith.mulf %247, %251 : vector<8x32xf32>
    %253 = vector.broadcast %233 : vector<1x32xf32> to vector<8x32xf32>
    %254 = arith.mulf %252, %253 : vector<8x32xf32>
    %255 = vector.broadcast %234 : vector<1x32xf32> to vector<8x32xf32>
    %256 = arith.addf %254, %255 : vector<8x32xf32>
    %257 = arith.truncf %256 : vector<8x32xf32> to vector<8x32xbf16>
    %c0_83 = arith.constant 0 : index
    %c0_84 = arith.constant 0 : index
    %258 = vector.load %arg19[%c0_83, %c0_84] : memref<32x128xbf16, #tpu.memory_space<vmem>>, vector<32x128xbf16>
    %cst_85 = arith.constant dense<0.000000e+00> : vector<8x128xf32>
    %259 = tpu.matmul %257, %258, %cst_85 {dimension_numbers = #tpu.dot_dimension_numbers<[1], [0], [0], [1], [0, 0, 1, 1], [], []>} : vector<8x32xbf16>, vector<32x128xbf16>, vector<8x128xf32> -> vector<8x128xf32>
    %c0_86 = arith.constant 0 : index
    %c0_87 = arith.constant 0 : index
    %260 = vector.load %arg20[%c0_86, %c0_87] : memref<1x128xf32, #tpu.memory_space<vmem>>, vector<1x128xf32>
    %261 = vector.broadcast %260 : vector<1x128xf32> to vector<8x128xf32>
    %262 = arith.addf %259, %261 : vector<8x128xf32>
    %cst_88 = arith.constant 0.000000e+00 : f32
    %263 = vector.broadcast %cst_88 : f32 to vector<8x128xf32>
    %264 = arith.maximumf %262, %263 : vector<8x128xf32>
    %265 = arith.truncf %264 : vector<8x128xf32> to vector<8x128xbf16>
    %c0_89 = arith.constant 0 : index
    %c0_90 = arith.constant 0 : index
    %266 = vector.load %arg21[%c0_89, %c0_90] : memref<128x32xbf16, #tpu.memory_space<vmem>>, vector<128x32xbf16>
    %cst_91 = arith.constant dense<0.000000e+00> : vector<8x32xf32>
    %267 = tpu.matmul %265, %266, %cst_91 {dimension_numbers = #tpu.dot_dimension_numbers<[1], [0], [0], [1], [0, 0, 1, 1], [], []>} : vector<8x128xbf16>, vector<128x32xbf16>, vector<8x32xf32> -> vector<8x32xf32>
    %c0_92 = arith.constant 0 : index
    %c0_93 = arith.constant 0 : index
    %268 = vector.load %arg22[%c0_92, %c0_93] : memref<1x32xf32, #tpu.memory_space<vmem>>, vector<1x32xf32>
    %269 = vector.broadcast %268 : vector<1x32xf32> to vector<8x32xf32>
    %270 = arith.addf %267, %269 : vector<8x32xf32>
    %271 = arith.addf %256, %270 : vector<8x32xf32>
    %c0_94 = arith.constant 0 : index
    %c0_95 = arith.constant 0 : index
    %272 = vector.load %arg17[%c0_94, %c0_95] : memref<1x32xf32, #tpu.memory_space<vmem>>, vector<1x32xf32>
    %c0_96 = arith.constant 0 : index
    %c0_97 = arith.constant 0 : index
    %273 = vector.load %arg18[%c0_96, %c0_97] : memref<1x32xf32, #tpu.memory_space<vmem>>, vector<1x32xf32>
    %cst_98 = arith.constant dense<0.000000e+00> : vector<8xf32>
    %274 = vector.multi_reduction <add>, %271, %cst_98 [1] : vector<8x32xf32> to vector<8xf32>
    %275 = vector.shape_cast %274 : vector<8xf32> to vector<8x1xf32>
    %cst_99 = arith.constant 3.200000e+01 : f32
    %276 = vector.broadcast %cst_99 : f32 to vector<8x1xf32>
    %277 = arith.divf %275, %276 : vector<8x1xf32>
    %278 = vector.broadcast %277 : vector<8x1xf32> to vector<8x32xf32>
    %279 = arith.subf %271, %278 : vector<8x32xf32>
    %280 = arith.mulf %279, %279 : vector<8x32xf32>
    %cst_100 = arith.constant dense<0.000000e+00> : vector<8xf32>
    %281 = vector.multi_reduction <add>, %280, %cst_100 [1] : vector<8x32xf32> to vector<8xf32>
    %282 = vector.shape_cast %281 : vector<8xf32> to vector<8x1xf32>
    %cst_101 = arith.constant 3.200000e+01 : f32
    %283 = vector.broadcast %cst_101 : f32 to vector<8x1xf32>
    %284 = arith.divf %282, %283 : vector<8x1xf32>
    %285 = vector.broadcast %277 : vector<8x1xf32> to vector<8x32xf32>
    %286 = arith.subf %271, %285 : vector<8x32xf32>
    %cst_102 = arith.constant 9.99999974E-6 : f32
    %287 = vector.broadcast %cst_102 : f32 to vector<8x1xf32>
    %288 = arith.addf %284, %287 : vector<8x1xf32>
    %289 = math.rsqrt %288 : vector<8x1xf32>
    %290 = vector.broadcast %289 : vector<8x1xf32> to vector<8x32xf32>
    %291 = arith.mulf %286, %290 : vector<8x32xf32>
    %292 = vector.broadcast %272 : vector<1x32xf32> to vector<8x32xf32>
    %293 = arith.mulf %291, %292 : vector<8x32xf32>
    %294 = vector.broadcast %273 : vector<1x32xf32> to vector<8x32xf32>
    %295 = arith.addf %293, %294 : vector<8x32xf32>
    %c0_103 = arith.constant 0 : index
    %c0_104 = arith.constant 0 : index
    %c0_105 = arith.constant 0 : index
    %296 = vector.load %arg23[%c0_103, %c0_104, %c0_105] : memref<1x8x32xf32, #tpu.memory_space<vmem>>, vector<1x8x32xf32>
    %297 = vector.shape_cast %296 : vector<1x8x32xf32> to vector<8x32xf32>
    %298 = vector.shape_cast %295 : vector<8x32xf32> to vector<1x8x32xf32>
    tpu.vector_store %arg23[%c0_103, %c0_104, %c0_105], %298 {strides = array<i32>} : memref<1x8x32xf32, #tpu.memory_space<vmem>>, vector<1x8x32xf32>,
    return
  }
  func.func @transform_0(%arg0: i32) -> (i32, i32, i32) {
    %c0_i32 = arith.constant 0 : i32
    %c0_i32_0 = arith.constant 0 : i32
    %c0_i32_1 = arith.constant 0 : i32
    return %arg0, %c0_i32, %c0_i32_0 : i32, i32, i32
  }
  func.func @transform_1(%arg0: i32) -> (i32, i32, i32) {
    %c0_i32 = arith.constant 0 : i32
    %c0_i32_0 = arith.constant 0 : i32
    %c0_i32_1 = arith.constant 0 : i32
    return %arg0, %c0_i32, %c0_i32_0 : i32, i32, i32
  }
  func.func @transform_2(%arg0: i32) -> (i32, i32) {
    %c0_i32 = arith.constant 0 : i32
    %c0_i32_0 = arith.constant 0 : i32
    %c0_i32_1 = arith.constant 0 : i32
    return %c0_i32, %c0_i32_0 : i32, i32
  }
  func.func @transform_3(%arg0: i32) -> (i32, i32) {
    %c0_i32 = arith.constant 0 : i32
    %c0_i32_0 = arith.constant 0 : i32
    %c0_i32_1 = arith.constant 0 : i32
    return %c0_i32, %c0_i32_0 : i32, i32
  }
  func.func @transform_4(%arg0: i32) -> (i32, i32) {
    %c0_i32 = arith.constant 0 : i32
    %c0_i32_0 = arith.constant 0 : i32
    %c0_i32_1 = arith.constant 0 : i32
    return %c0_i32, %c0_i32_0 : i32, i32
  }
  func.func @transform_5(%arg0: i32) -> (i32, i32) {
    %c0_i32 = arith.constant 0 : i32
    %c0_i32_0 = arith.constant 0 : i32
    %c0_i32_1 = arith.constant 0 : i32
    return %c0_i32, %c0_i32_0 : i32, i32
  }
  func.func @transform_6(%arg0: i32) -> (i32, i32) {
    %c0_i32 = arith.constant 0 : i32
    %c0_i32_0 = arith.constant 0 : i32
    %c0_i32_1 = arith.constant 0 : i32
    return %c0_i32, %c0_i32_0 : i32, i32
  }
  func.func @transform_7(%arg0: i32) -> (i32, i32) {
    %c0_i32 = arith.constant 0 : i32
    %c0_i32_0 = arith.constant 0 : i32
    %c0_i32_1 = arith.constant 0 : i32
    return %c0_i32, %c0_i32_0 : i32, i32
  }
  func.func @transform_8(%arg0: i32) -> (i32, i32) {
    %c0_i32 = arith.constant 0 : i32
    %c0_i32_0 = arith.constant 0 : i32
    %c0_i32_1 = arith.constant 0 : i32
    return %c0_i32, %c0_i32_0 : i32, i32
  }
  func.func @transform_9(%arg0: i32) -> (i32, i32) {
    %c0_i32 = arith.constant 0 : i32
    %c0_i32_0 = arith.constant 0 : i32
    %c0_i32_1 = arith.constant 0 : i32
    return %c0_i32, %c0_i32_0 : i32, i32
  }
  func.func @transform_10(%arg0: i32) -> (i32, i32) {
    %c0_i32 = arith.constant 0 : i32
    %c0_i32_0 = arith.constant 0 : i32
    %c0_i32_1 = arith.constant 0 : i32
    return %c0_i32, %c0_i32_0 : i32, i32
  }
  func.func @transform_11(%arg0: i32) -> (i32, i32) {
    %c0_i32 = arith.constant 0 : i32
    %c0_i32_0 = arith.constant 0 : i32
    %c0_i32_1 = arith.constant 0 : i32
    return %c0_i32, %c0_i32_0 : i32, i32
  }
  func.func @transform_12(%arg0: i32) -> (i32, i32) {
    %c0_i32 = arith.constant 0 : i32
    %c0_i32_0 = arith.constant 0 : i32
    %c0_i32_1 = arith.constant 0 : i32
    return %c0_i32, %c0_i32_0 : i32, i32
  }
  func.func @transform_13(%arg0: i32) -> (i32, i32) {
    %c0_i32 = arith.constant 0 : i32
    %c0_i32_0 = arith.constant 0 : i32
    %c0_i32_1 = arith.constant 0 : i32
    return %c0_i32, %c0_i32_0 : i32, i32
  }
  func.func @transform_14(%arg0: i32) -> (i32, i32) {
    %c0_i32 = arith.constant 0 : i32
    %c0_i32_0 = arith.constant 0 : i32
    %c0_i32_1 = arith.constant 0 : i32
    return %c0_i32, %c0_i32_0 : i32, i32
  }
  func.func @transform_15(%arg0: i32) -> (i32, i32) {
    %c0_i32 = arith.constant 0 : i32
    %c0_i32_0 = arith.constant 0 : i32
    %c0_i32_1 = arith.constant 0 : i32
    return %c0_i32, %c0_i32_0 : i32, i32
  }
  func.func @transform_16(%arg0: i32) -> (i32, i32) {
    %c0_i32 = arith.constant 0 : i32
    %c0_i32_0 = arith.constant 0 : i32
    %c0_i32_1 = arith.constant 0 : i32
    return %c0_i32, %c0_i32_0 : i32, i32
  }
  func.func @transform_17(%arg0: i32) -> (i32, i32) {
    %c0_i32 = arith.constant 0 : i32
    %c0_i32_0 = arith.constant 0 : i32
    %c0_i32_1 = arith.constant 0 : i32
    return %c0_i32, %c0_i32_0 : i32, i32
  }
  func.func @transform_18(%arg0: i32) -> (i32, i32) {
    %c0_i32 = arith.constant 0 : i32
    %c0_i32_0 = arith.constant 0 : i32
    %c0_i32_1 = arith.constant 0 : i32
    return %c0_i32, %c0_i32_0 : i32, i32
  }
  func.func @transform_19(%arg0: i32) -> (i32, i32) {
    %c0_i32 = arith.constant 0 : i32
    %c0_i32_0 = arith.constant 0 : i32
    %c0_i32_1 = arith.constant 0 : i32
    return %c0_i32, %c0_i32_0 : i32, i32
  }
  func.func @transform_20(%arg0: i32) -> (i32, i32) {
    %c0_i32 = arith.constant 0 : i32
    %c0_i32_0 = arith.constant 0 : i32
    %c0_i32_1 = arith.constant 0 : i32
    return %c0_i32, %c0_i32_0 : i32, i32
  }
  func.func @transform_21(%arg0: i32) -> (i32, i32) {
    %c0_i32 = arith.constant 0 : i32
    %c0_i32_0 = arith.constant 0 : i32
    %c0_i32_1 = arith.constant 0 : i32
    return %c0_i32, %c0_i32_0 : i32, i32
  }
  func.func @transform_22(%arg0: i32) -> (i32, i32, i32) {
    %c0_i32 = arith.constant 0 : i32
    %c0_i32_0 = arith.constant 0 : i32
    %c0_i32_1 = arith.constant 0 : i32
    return %arg0, %c0_i32, %c0_i32_0 : i32, i32, i32
  }
}

</mosaic_0001>

<llo_original>
// kernel: decoder_layer_forward.1
$region0: #{decoder_layer_forward.1}
  #allocation0 [shape = 'u32[]', space=smem, size = 0x4, offset = 0x4, fixed_abs, tag = 'smem constant byte address 0x4 - core index']
  #allocation1 [shape = 'u32[144,128]{1,0:T(1,128)}', space=vmem, size = 0x12000, scoped, tag = 'internal scratch']
  %s0 = inlined_call_operand.vmem [shape: f32[2,8,32], index: 0, kind: input, shape index: {}]
  %s1 = inlined_call_operand.vmem [shape: f32[2,12,32], index: 1, kind: input, shape index: {}]
  %s2 = inlined_call_operand.vmem [shape: bf16[32,96], index: 2, kind: input, shape index: {}]
  %s3 = inlined_call_operand.vmem [shape: f32[1,96], index: 3, kind: input, shape index: {}]
  %s4 = inlined_call_operand.vmem [shape: bf16[32,32], index: 4, kind: input, shape index: {}]
  %s5 = inlined_call_operand.vmem [shape: f32[1,32], index: 5, kind: input, shape index: {}]
  %s6 = inlined_call_operand.vmem [shape: bf16[32,32], index: 6, kind: input, shape index: {}]
  %s7 = inlined_call_operand.vmem [shape: f32[1,32], index: 7, kind: input, shape index: {}]
  %s8 = inlined_call_operand.vmem [shape: bf16[32,64], index: 8, kind: input, shape index: {}]
  %s9 = inlined_call_operand.vmem [shape: f32[1,64], index: 9, kind: input, shape index: {}]
  %s10 = inlined_call_operand.vmem [shape: bf16[32,32], index: 10, kind: input, shape index: {}]
  %s11 = inlined_call_operand.vmem [shape: f32[1,32], index: 11, kind: input, shape index: {}]
  %s12 = inlined_call_operand.vmem [shape: f32[1,32], index: 12, kind: input, shape index: {}]
  %s13 = inlined_call_operand.vmem [shape: f32[1,32], index: 13, kind: input, shape index: {}]
  %s14 = inlined_call_operand.vmem [shape: f32[1,32], index: 14, kind: input, shape index: {}]
  %s15 = inlined_call_operand.vmem [shape: f32[1,32], index: 15, kind: input, shape index: {}]
  %s16 = inlined_call_operand.vmem [shape: f32[1,32], index: 16, kind: input, shape index: {}]
  %s17 = inlined_call_operand.vmem [shape: f32[1,32], index: 17, kind: input, shape index: {}]
  %s18 = inlined_call_operand.vmem [shape: bf16[32,128], index: 18, kind: input, shape index: {}]
  %s19 = inlined_call_operand.vmem [shape: f32[1,128], index: 19, kind: input, shape index: {}]
  %s20 = inlined_call_operand.vmem [shape: bf16[128,32], index: 20, kind: input, shape index: {}]
  %s21 = inlined_call_operand.vmem [shape: f32[1,32], index: 21, kind: input, shape index: {}]
  %s22 = inlined_call_operand.hbm [shape: f32[2,8,32], index: 22, kind: output, shape index: {}]
  %s23 = sld [smem:[#allocation0]]
  $region121: #{decoder_layer_forward.1} parent=0
    _
  %s25 = ssub.s32 1, %s23
  %s26 = scalar_select 0, %s25, %s23
  $region1: #{decoder_layer_forward.1} parent=0
    #allocation2 [shape = 'u8[8192]{0}', space=vmem, size = 0x2000, scoped, tag = 'output window, operand 0']
    #allocation3 [shape = 's32[2]{0}', space=sflag, size = 0x8, scoped, tag = 'scoped memory for decoder_layer_forward.1']
    %27 = vsyncpa [#allocation3], 0
    %s28 = scalar_lea.sflag [#allocation3], 1
    %29 = vsyncpa %s28, 0
    loop: start=0, step=1, limit=4
    $region2: #{decoder_layer_forward.1} parent=1 // loop_pre_header
      _
    $region3: #{decoder_layer_forward.1} parent=1 // loop_header
      %s31 = sphi 0, %s35
      %p32 = scmp.ge.s32.totalorder %s31, 4
      %s41 = sphi 0, %s43
      %s44 = sphi 0, %s41
      %s45 = sphi 0, %s44
      %s61 = sphi 0, %s45
      %s67 = sphi 0, %s69
      %s70 = sphi 0, %s67
      %s71 = sphi 0, %s70
      %s87 = sphi 0, %s71
      %s91 = sphi 0, %s91
      %s93 = sphi 0, %s91
      %s94 = sphi 0, %s93
      %s108 = sphi 0, %s94
      %s112 = sphi 0, %s112
      %s114 = sphi 0, %s112
      %s115 = sphi 0, %s114
      %s129 = sphi 0, %s115
      %s133 = sphi 0, %s133
      %s135 = sphi 0, %s133
      %s136 = sphi 0, %s135
      %s150 = sphi 0, %s136
      %s154 = sphi 0, %s154
      %s156 = sphi 0, %s154
      %s157 = sphi 0, %s156
      %s171 = sphi 0, %s157
      %s175 = sphi 0, %s175
      %s177 = sphi 0, %s175
      %s178 = sphi 0, %s177
      %s192 = sphi 0, %s178
      %s196 = sphi 0, %s196
      %s198 = sphi 0, %s196
      %s199 = sphi 0, %s198
      %s213 = sphi 0, %s199
      %s217 = sphi 0, %s217
      %s219 = sphi 0, %s217
      %s220 = sphi 0, %s219
      %s234 = sphi 0, %s220
      %s238 = sphi 0, %s238
      %s240 = sphi 0, %s238
      %s241 = sphi 0, %s240
      %s255 = sphi 0, %s241
      %s259 = sphi 0, %s259
      %s261 = sphi 0, %s259
      %s262 = sphi 0, %s261
      %s276 = sphi 0, %s262
      %s280 = sphi 0, %s280
      %s282 = sphi 0, %s280
      %s283 = sphi 0, %s282
      %s297 = sphi 0, %s283
      %s301 = sphi 0, %s301
      %s303 = sphi 0, %s301
      %s304 = sphi 0, %s303
      %s318 = sphi 0, %s304
      %s322 = sphi 0, %s322
      %s324 = sphi 0, %s322
      %s325 = sphi 0, %s324
      %s339 = sphi 0, %s325
      %s343 = sphi 0, %s343
      %s345 = sphi 0, %s343
      %s346 = sphi 0, %s345
      %s360 = sphi 0, %s346
      %s364 = sphi 0, %s364
      %s366 = sphi 0, %s364
      %s367 = sphi 0, %s366
      %s381 = sphi 0, %s367
      %s385 = sphi 0, %s385
      %s387 = sphi 0, %s385
      %s388 = sphi 0, %s387
      %s402 = sphi 0, %s388
      %s406 = sphi 0, %s406
      %s408 = sphi 0, %s406
      %s409 = sphi 0, %s408
      %s423 = sphi 0, %s409
      %s427 = sphi 0, %s427
      %s429 = sphi 0, %s427
      %s430 = sphi 0, %s429
      %s444 = sphi 0, %s430
      %s448 = sphi 0, %s448
      %s450 = sphi 0, %s448
      %s451 = sphi 0, %s450
      %s465 = sphi 0, %s451
      %s469 = sphi 0, %s469
      %s471 = sphi 0, %s469
      %s472 = sphi 0, %s471
      %s486 = sphi 0, %s472
      %s490 = sphi 0, %s490
      %s492 = sphi 0, %s490
      %s493 = sphi 0, %s492
      %s507 = sphi 0, %s493
      %s513 = sphi 0, %s515
      %s516 = sphi 0, %s513
      %s517 = sphi 0, %s516
      %s533 = sphi 0, %s517
    $region4: #{decoder_layer_forward.1} parent=1 // loop_header_branch
      %34 = sbr.rel (%p32) target = $region8
    $region5: #{decoder_layer_forward.1} parent=1 // loop_body
      %s36 = ssub.s32 %s31, 1
      %s37 = ssub.s32 %s31, 2
      %s38 = sadd.s32 %s31, 1
      %s39 = ssub.s32 %s31, %s38
      %p40 = scmp.eq.s32.totalorder %s39, 0
      %s42 = sadd.s32 %s41, 1
      %s43 = scalar_select %p40, %s41, %s42
      %p46 = pneg %p40
      %p47 = scmp.eq.s32.totalorder %s31, 1
      %p48 = por %p46, %p47
      %p49 = scmp.ne.s32.totalorder %s41, %s44
      %p50 = scmp.eq.s32.totalorder %s31, 0
      %p51 = por %p49, %p50
      %p52 = scmp.ne.s32.totalorder %s41, %s44
      %p53 = scmp.eq.s32.totalorder %s36, 1
      %p54 = por %p52, %p53
      %p55 = scmp.ne.s32.totalorder %s44, %s45
      %p56 = scmp.eq.s32.totalorder %s36, 0
      %p57 = por %p55, %p56
      %p58 = scmp.ne.s32.totalorder %s44, %s45
      %p59 = scmp.eq.s32.totalorder %s37, 1
      %p60 = por %p58, %p59
      %p62 = scmp.ne.s32.totalorder %s45, %s61
      %p63 = scmp.eq.s32.totalorder %s37, 0
      %p64 = por %p62, %p63
      %s65 = ssub.s32 %s31, %s38
      %p66 = scmp.eq.s32.totalorder %s65, 0
      %s68 = sadd.s32 %s67, 1
      %s69 = scalar_select %p66, %s67, %s68
      %p72 = pneg %p66
      %p73 = scmp.eq.s32.totalorder %s31, 1
      %p74 = por %p72, %p73
      %p75 = scmp.ne.s32.totalorder %s67, %s70
      %p76 = scmp.eq.s32.totalorder %s31, 0
      %p77 = por %p75, %p76
      %p78 = scmp.ne.s32.totalorder %s67, %s70
      %p79 = scmp.eq.s32.totalorder %s36, 1
      %p80 = por %p78, %p79
      %p81 = scmp.ne.s32.totalorder %s70, %s71
      %p82 = scmp.eq.s32.totalorder %s36, 0
      %p83 = por %p81, %p82
      %p84 = scmp.ne.s32.totalorder %s70, %s71
      %p85 = scmp.eq.s32.totalorder %s37, 1
      %p86 = por %p84, %p85
      %p88 = scmp.ne.s32.totalorder %s71, %s87
      %p89 = scmp.eq.s32.totalorder %s37, 0
      %p90 = por %p88, %p89
      %s92 = sadd.s32 %s91, 1
      %p95 = scmp.eq.s32.totalorder %s31, 1
      %p96 = scmp.ne.s32.totalorder %s91, %s93
      %p97 = scmp.eq.s32.totalorder %s31, 0
      %p98 = por %p96, %p97
      %p99 = scmp.ne.s32.totalorder %s91, %s93
      %p100 = scmp.eq.s32.totalorder %s36, 1
      %p101 = por %p99, %p100
      %p102 = scmp.ne.s32.totalorder %s93, %s94
      %p103 = scmp.eq.s32.totalorder %s36, 0
      %p104 = por %p102, %p103
      %p105 = scmp.ne.s32.totalorder %s93, %s94
      %p106 = scmp.eq.s32.totalorder %s37, 1
      %p107 = por %p105, %p106
      %p109 = scmp.ne.s32.totalorder %s94, %s108
      %p110 = scmp.eq.s32.totalorder %s37, 0
      %p111 = por %p109, %p110
      %s113 = sadd.s32 %s112, 1
      %p116 = scmp.eq.s32.totalorder %s31, 1
      %p117 = scmp.ne.s32.totalorder %s112, %s114
      %p118 = scmp.eq.s32.totalorder %s31, 0
      %p119 = por %p117, %p118
      %p120 = scmp.ne.s32.totalorder %s112, %s114
      %p121 = scmp.eq.s32.totalorder %s36, 1
      %p122 = por %p120, %p121
      %p123 = scmp.ne.s32.totalorder %s114, %s115
      %p124 = scmp.eq.s32.totalorder %s36, 0
      %p125 = por %p123, %p124
      %p126 = scmp.ne.s32.totalorder %s114, %s115
      %p127 = scmp.eq.s32.totalorder %s37, 1
      %p128 = por %p126, %p127
      %p130 = scmp.ne.s32.totalorder %s115, %s129
      %p131 = scmp.eq.s32.totalorder %s37, 0
      %p132 = por %p130, %p131
      %s134 = sadd.s32 %s133, 1
      %p137 = scmp.eq.s32.totalorder %s31, 1
      %p138 = scmp.ne.s32.totalorder %s133, %s135
      %p139 = scmp.eq.s32.totalorder %s31, 0
      %p140 = por %p138, %p139
      %p141 = scmp.ne.s32.totalorder %s133, %s135
      %p142 = scmp.eq.s32.totalorder %s36, 1
      %p143 = por %p141, %p142
      %p144 = scmp.ne.s32.totalorder %s135, %s136
      %p145 = scmp.eq.s32.totalorder %s36, 0
      %p146 = por %p144, %p145
      %p147 = scmp.ne.s32.totalorder %s135, %s136
      %p148 = scmp.eq.s32.totalorder %s37, 1
      %p149 = por %p147, %p148
      %p151 = scmp.ne.s32.totalorder %s136, %s150
      %p152 = scmp.eq.s32.totalorder %s37, 0
      %p153 = por %p151, %p152
      %s155 = sadd.s32 %s154, 1
      %p158 = scmp.eq.s32.totalorder %s31, 1
      %p159 = scmp.ne.s32.totalorder %s154, %s156
      %p160 = scmp.eq.s32.totalorder %s31, 0
      %p161 = por %p159, %p160
      %p162 = scmp.ne.s32.totalorder %s154, %s156
      %p163 = scmp.eq.s32.totalorder %s36, 1
      %p164 = por %p162, %p163
      %p165 = scmp.ne.s32.totalorder %s156, %s157
      %p166 = scmp.eq.s32.totalorder %s36, 0
      %p167 = por %p165, %p166
      %p168 = scmp.ne.s32.totalorder %s156, %s157
      %p169 = scmp.eq.s32.totalorder %s37, 1
      %p170 = por %p168, %p169
      %p172 = scmp.ne.s32.totalorder %s157, %s171
      %p173 = scmp.eq.s32.totalorder %s37, 0
      %p174 = por %p172, %p173
      %s176 = sadd.s32 %s175, 1
      %p179 = scmp.eq.s32.totalorder %s31, 1
      %p180 = scmp.ne.s32.totalorder %s175, %s177
      %p181 = scmp.eq.s32.totalorder %s31, 0
      %p182 = por %p180, %p181
      %p183 = scmp.ne.s32.totalorder %s175, %s177
      %p184 = scmp.eq.s32.totalorder %s36, 1
      %p185 = por %p183, %p184
      %p186 = scmp.ne.s32.totalorder %s177, %s178
      %p187 = scmp.eq.s32.totalorder %s36, 0
      %p188 = por %p186, %p187
      %p189 = scmp.ne.s32.totalorder %s177, %s178
      %p190 = scmp.eq.s32.totalorder %s37, 1
      %p191 = por %p189, %p190
      %p193 = scmp.ne.s32.totalorder %s178, %s192
      %p194 = scmp.eq.s32.totalorder %s37, 0
      %p195 = por %p193, %p194
      %s197 = sadd.s32 %s196, 1
      %p200 = scmp.eq.s32.totalorder %s31, 1
      %p201 = scmp.ne.s32.totalorder %s196, %s198
      %p202 = scmp.eq.s32.totalorder %s31, 0
      %p203 = por %p201, %p202
      %p204 = scmp.ne.s32.totalorder %s196, %s198
      %p205 = scmp.eq.s32.totalorder %s36, 1
      %p206 = por %p204, %p205
      %p207 = scmp.ne.s32.totalorder %s198, %s199
      %p208 = scmp.eq.s32.totalorder %s36, 0
      %p209 = por %p207, %p208
      %p210 = scmp.ne.s32.totalorder %s198, %s199
      %p211 = scmp.eq.s32.totalorder %s37, 1
      %p212 = por %p210, %p211
      %p214 = scmp.ne.s32.totalorder %s199, %s213
      %p215 = scmp.eq.s32.totalorder %s37, 0
      %p216 = por %p214, %p215
      %s218 = sadd.s32 %s217, 1
      %p221 = scmp.eq.s32.totalorder %s31, 1
      %p222 = scmp.ne.s32.totalorder %s217, %s219
      %p223 = scmp.eq.s32.totalorder %s31, 0
      %p224 = por %p222, %p223
      %p225 = scmp.ne.s32.totalorder %s217, %s219
      %p226 = scmp.eq.s32.totalorder %s36, 1
      %p227 = por %p225, %p226
      %p228 = scmp.ne.s32.totalorder %s219, %s220
      %p229 = scmp.eq.s32.totalorder %s36, 0
      %p230 = por %p228, %p229
      %p231 = scmp.ne.s32.totalorder %s219, %s220
      %p232 = scmp.eq.s32.totalorder %s37, 1
      %p233 = por %p231, %p232
      %p235 = scmp.ne.s32.totalorder %s220, %s234
      %p236 = scmp.eq.s32.totalorder %s37, 0
      %p237 = por %p235, %p236
      %s239 = sadd.s32 %s238, 1
      %p242 = scmp.eq.s32.totalorder %s31, 1
      %p243 = scmp.ne.s32.totalorder %s238, %s240
      %p244 = scmp.eq.s32.totalorder %s31, 0
      %p245 = por %p243, %p244
      %p246 = scmp.ne.s32.totalorder %s238, %s240
      %p247 = scmp.eq.s32.totalorder %s36, 1
      %p248 = por %p246, %p247
      %p249 = scmp.ne.s32.totalorder %s240, %s241
      %p250 = scmp.eq.s32.totalorder %s36, 0
      %p251 = por %p249, %p250
      %p252 = scmp.ne.s32.totalorder %s240, %s241
      %p253 = scmp.eq.s32.totalorder %s37, 1
      %p254 = por %p252, %p253
      %p256 = scmp.ne.s32.totalorder %s241, %s255
      %p257 = scmp.eq.s32.totalorder %s37, 0
      %p258 = por %p256, %p257
      %s260 = sadd.s32 %s259, 1
      %p263 = scmp.eq.s32.totalorder %s31, 1
      %p264 = scmp.ne.s32.totalorder %s259, %s261
      %p265 = scmp.eq.s32.totalorder %s31, 0
      %p266 = por %p264, %p265
      %p267 = scmp.ne.s32.totalorder %s259, %s261
      %p268 = scmp.eq.s32.totalorder %s36, 1
      %p269 = por %p267, %p268
      %p270 = scmp.ne.s32.totalorder %s261, %s262
      %p271 = scmp.eq.s32.totalorder %s36, 0
      %p272 = por %p270, %p271
      %p273 = scmp.ne.s32.totalorder %s261, %s262
      %p274 = scmp.eq.s32.totalorder %s37, 1
      %p275 = por %p273, %p274
      %p277 = scmp.ne.s32.totalorder %s262, %s276
      %p278 = scmp.eq.s32.totalorder %s37, 0
      %p279 = por %p277, %p278
      %s281 = sadd.s32 %s280, 1
      %p284 = scmp.eq.s32.totalorder %s31, 1
      %p285 = scmp.ne.s32.totalorder %s280, %s282
      %p286 = scmp.eq.s32.totalorder %s31, 0
      %p287 = por %p285, %p286
      %p288 = scmp.ne.s32.totalorder %s280, %s282
      %p289 = scmp.eq.s32.totalorder %s36, 1
      %p290 = por %p288, %p289
      %p291 = scmp.ne.s32.totalorder %s282, %s283
      %p292 = scmp.eq.s32.totalorder %s36, 0
      %p293 = por %p291, %p292
      %p294 = scmp.ne.s32.totalorder %s282, %s283
      %p295 = scmp.eq.s32.totalorder %s37, 1
      %p296 = por %p294, %p295
      %p298 = scmp.ne.s32.totalorder %s283, %s297
      %p299 = scmp.eq.s32.totalorder %s37, 0
      %p300 = por %p298, %p299
      %s302 = sadd.s32 %s301, 1
      %p305 = scmp.eq.s32.totalorder %s31, 1
      %p306 = scmp.ne.s32.totalorder %s301, %s303
      %p307 = scmp.eq.s32.totalorder %s31, 0
      %p308 = por %p306, %p307
      %p309 = scmp.ne.s32.totalorder %s301, %s303
      %p310 = scmp.eq.s32.totalorder %s36, 1
      %p311 = por %p309, %p310
      %p312 = scmp.ne.s32.totalorder %s303, %s304
      %p313 = scmp.eq.s32.totalorder %s36, 0
      %p314 = por %p312, %p313
      %p315 = scmp.ne.s32.totalorder %s303, %s304
      %p316 = scmp.eq.s32.totalorder %s37, 1
      %p317 = por %p315, %p316
      %p319 = scmp.ne.s32.totalorder %s304, %s318
      %p320 = scmp.eq.s32.totalorder %s37, 0
      %p321 = por %p319, %p320
      %s323 = sadd.s32 %s322, 1
      %p326 = scmp.eq.s32.totalorder %s31, 1
      %p327 = scmp.ne.s32.totalorder %s322, %s324
      %p328 = scmp.eq.s32.totalorder %s31, 0
      %p329 = por %p327, %p328
      %p330 = scmp.ne.s32.totalorder %s322, %s324
      %p331 = scmp.eq.s32.totalorder %s36, 1
      %p332 = por %p330, %p331
      %p333 = scmp.ne.s32.totalorder %s324, %s325
      %p334 = scmp.eq.s32.totalorder %s36, 0
      %p335 = por %p333, %p334
      %p336 = scmp.ne.s32.totalorder %s324, %s325
      %p337 = scmp.eq.s32.totalorder %s37, 1
      %p338 = por %p336, %p337
      %p340 = scmp.ne.s32.totalorder %s325, %s339
      %p341 = scmp.eq.s32.totalorder %s37, 0
      %p342 = por %p340, %p341
      %s344 = sadd.s32 %s343, 1
      %p347 = scmp.eq.s32.totalorder %s31, 1
      %p348 = scmp.ne.s32.totalorder %s343, %s345
      %p349 = scmp.eq.s32.totalorder %s31, 0
      %p350 = por %p348, %p349
      %p351 = scmp.ne.s32.totalorder %s343, %s345
      %p352 = scmp.eq.s32.totalorder %s36, 1
      %p353 = por %p351, %p352
      %p354 = scmp.ne.s32.totalorder %s345, %s346
      %p355 = scmp.eq.s32.totalorder %s36, 0
      %p356 = por %p354, %p355
      %p357 = scmp.ne.s32.totalorder %s345, %s346
      %p358 = scmp.eq.s32.totalorder %s37, 1
      %p359 = por %p357, %p358
      %p361 = scmp.ne.s32.totalorder %s346, %s360
      %p362 = scmp.eq.s32.totalorder %s37, 0
      %p363 = por %p361, %p362
      %s365 = sadd.s32 %s364, 1
      %p368 = scmp.eq.s32.totalorder %s31, 1
      %p369 = scmp.ne.s32.totalorder %s364, %s366
      %p370 = scmp.eq.s32.totalorder %s31, 0
      %p371 = por %p369, %p370
      %p372 = scmp.ne.s32.totalorder %s364, %s366
      %p373 = scmp.eq.s32.totalorder %s36, 1
      %p374 = por %p372, %p373
      %p375 = scmp.ne.s32.totalorder %s366, %s367
      %p376 = scmp.eq.s32.totalorder %s36, 0
      %p377 = por %p375, %p376
      %p378 = scmp.ne.s32.totalorder %s366, %s367
      %p379 = scmp.eq.s32.totalorder %s37, 1
      %p380 = por %p378, %p379
      %p382 = scmp.ne.s32.totalorder %s367, %s381
      %p383 = scmp.eq.s32.totalorder %s37, 0
      %p384 = por %p382, %p383
      %s386 = sadd.s32 %s385, 1
      %p389 = scmp.eq.s32.totalorder %s31, 1
      %p390 = scmp.ne.s32.totalorder %s385, %s387
      %p391 = scmp.eq.s32.totalorder %s31, 0
      %p392 = por %p390, %p391
      %p393 = scmp.ne.s32.totalorder %s385, %s387
      %p394 = scmp.eq.s32.totalorder %s36, 1
      %p395 = por %p393, %p394
      %p396 = scmp.ne.s32.totalorder %s387, %s388
      %p397 = scmp.eq.s32.totalorder %s36, 0
      %p398 = por %p396, %p397
      %p399 = scmp.ne.s32.totalorder %s387, %s388
      %p400 = scmp.eq.s32.totalorder %s37, 1
      %p401 = por %p399, %p400
      %p403 = scmp.ne.s32.totalorder %s388, %s402
      %p404 = scmp.eq.s32.totalorder %s37, 0
      %p405 = por %p403, %p404
      %s407 = sadd.s32 %s406, 1
      %p410 = scmp.eq.s32.totalorder %s31, 1
      %p411 = scmp.ne.s32.totalorder %s406, %s408
      %p412 = scmp.eq.s32.totalorder %s31, 0
      %p413 = por %p411, %p412
      %p414 = scmp.ne.s32.totalorder %s406, %s408
      %p415 = scmp.eq.s32.totalorder %s36, 1
      %p416 = por %p414, %p415
      %p417 = scmp.ne.s32.totalorder %s408, %s409
      %p418 = scmp.eq.s32.totalorder %s36, 0
      %p419 = por %p417, %p418
      %p420 = scmp.ne.s32.totalorder %s408, %s409
      %p421 = scmp.eq.s32.totalorder %s37, 1
      %p422 = por %p420, %p421
      %p424 = scmp.ne.s32.totalorder %s409, %s423
      %p425 = scmp.eq.s32.totalorder %s37, 0
      %p426 = por %p424, %p425
      %s428 = sadd.s32 %s427, 1
      %p431 = scmp.eq.s32.totalorder %s31, 1
      %p432 = scmp.ne.s32.totalorder %s427, %s429
      %p433 = scmp.eq.s32.totalorder %s31, 0
      %p434 = por %p432, %p433
      %p435 = scmp.ne.s32.totalorder %s427, %s429
      %p436 = scmp.eq.s32.totalorder %s36, 1
      %p437 = por %p435, %p436
      %p438 = scmp.ne.s32.totalorder %s429, %s430
      %p439 = scmp.eq.s32.totalorder %s36, 0
      %p440 = por %p438, %p439
      %p441 = scmp.ne.s32.totalorder %s429, %s430
      %p442 = scmp.eq.s32.totalorder %s37, 1
      %p443 = por %p441, %p442
      %p445 = scmp.ne.s32.totalorder %s430, %s444
      %p446 = scmp.eq.s32.totalorder %s37, 0
      %p447 = por %p445, %p446
      %s449 = sadd.s32 %s448, 1
      %p452 = scmp.eq.s32.totalorder %s31, 1
      %p453 = scmp.ne.s32.totalorder %s448, %s450
      %p454 = scmp.eq.s32.totalorder %s31, 0
      %p455 = por %p453, %p454
      %p456 = scmp.ne.s32.totalorder %s448, %s450
      %p457 = scmp.eq.s32.totalorder %s36, 1
      %p458 = por %p456, %p457
      %p459 = scmp.ne.s32.totalorder %s450, %s451
      %p460 = scmp.eq.s32.totalorder %s36, 0
      %p461 = por %p459, %p460
      %p462 = scmp.ne.s32.totalorder %s450, %s451
      %p463 = scmp.eq.s32.totalorder %s37, 1
      %p464 = por %p462, %p463
      %p466 = scmp.ne.s32.totalorder %s451, %s465
      %p467 = scmp.eq.s32.totalorder %s37, 0
      %p468 = por %p466, %p467
      %s470 = sadd.s32 %s469, 1
      %p473 = scmp.eq.s32.totalorder %s31, 1
      %p474 = scmp.ne.s32.totalorder %s469, %s471
      %p475 = scmp.eq.s32.totalorder %s31, 0
      %p476 = por %p474, %p475
      %p477 = scmp.ne.s32.totalorder %s469, %s471
      %p478 = scmp.eq.s32.totalorder %s36, 1
      %p479 = por %p477, %p478
      %p480 = scmp.ne.s32.totalorder %s471, %s472
      %p481 = scmp.eq.s32.totalorder %s36, 0
      %p482 = por %p480, %p481
      %p483 = scmp.ne.s32.totalorder %s471, %s472
      %p484 = scmp.eq.s32.totalorder %s37, 1
      %p485 = por %p483, %p484
      %p487 = scmp.ne.s32.totalorder %s472, %s486
      %p488 = scmp.eq.s32.totalorder %s37, 0
      %p489 = por %p487, %p488
      %s491 = sadd.s32 %s490, 1
      %p494 = scmp.eq.s32.totalorder %s31, 1
      %p495 = scmp.ne.s32.totalorder %s490, %s492
      %p496 = scmp.eq.s32.totalorder %s31, 0
      %p497 = por %p495, %p496
      %p498 = scmp.ne.s32.totalorder %s490, %s492
      %p499 = scmp.eq.s32.totalorder %s36, 1
      %p500 = por %p498, %p499
      %p501 = scmp.ne.s32.totalorder %s492, %s493
      %p502 = scmp.eq.s32.totalorder %s36, 0
      %p503 = por %p501, %p502
      %p504 = scmp.ne.s32.totalorder %s492, %s493
      %p505 = scmp.eq.s32.totalorder %s37, 1
      %p506 = por %p504, %p505
      %p508 = scmp.ne.s32.totalorder %s493, %s507
      %p509 = scmp.eq.s32.totalorder %s37, 0
      %p510 = por %p508, %p509
      %s511 = ssub.s32 %s31, %s38
      %p512 = scmp.eq.s32.totalorder %s511, 0
      %s514 = sadd.s32 %s513, 1
      %s515 = scalar_select %p512, %s513, %s514
      %p518 = pneg %p512
      %p519 = scmp.eq.s32.totalorder %s31, 1
      %p520 = por %p518, %p519
      %p521 = scmp.ne.s32.totalorder %s513, %s516
      %p522 = scmp.eq.s32.totalorder %s31, 0
      %p523 = por %p521, %p522
      %p524 = scmp.ne.s32.totalorder %s513, %s516
      %p525 = scmp.eq.s32.totalorder %s36, 1
      %p526 = por %p524, %p525
      %p527 = scmp.ne.s32.totalorder %s516, %s517
      %p528 = scmp.eq.s32.totalorder %s36, 0
      %p529 = por %p527, %p528
      %p530 = scmp.ne.s32.totalorder %s516, %s517
      %p531 = scmp.eq.s32.totalorder %s37, 1
      %p532 = por %p530, %p531
      %p534 = scmp.ne.s32.totalorder %s517, %s533
      %p535 = scmp.eq.s32.totalorder %s37, 0
      %p536 = por %p534, %p535
      %p537 = scmp.le.s32.totalorder 1, %s31
      %p538 = scmp.lt.s32.totalorder %s31, 3
      %p539 = pnand %p537, %p538
      %p540 = pneg %p539
      // Predicated region
      $region9: #{decoder_layer_forward.1} parent=5 // pred_check
        _
      $region10: #{decoder_layer_forward.1} parent=5 // pred_check_branch
        %542 = sbr.rel (%p539) target = $region12
      $region11: #{decoder_layer_forward.1} parent=5 // pred_region
        %s543 = ssub.s32 %s31, 1
        // Predicated region
        $region13: #{decoder_layer_forward.1} parent=11 // pred_check
          %p544 = pneg %p104
        $region14: #{decoder_layer_forward.1} parent=11 // pred_check_branch
          %546 = sbr.rel (%p544) target = $region16
        $region15: #{decoder_layer_forward.1} parent=11 // pred_region
          _
        $region16: #{decoder_layer_forward.1} parent=11 // pred_fallthru
          _
        // Predicated region
        $region17: #{decoder_layer_forward.1} parent=11 // pred_check
          %p547 = pneg %p125
        $region18: #{decoder_layer_forward.1} parent=11 // pred_check_branch
          %549 = sbr.rel (%p547) target = $region20
        $region19: #{decoder_layer_forward.1} parent=11 // pred_region
          _
        $region20: #{decoder_layer_forward.1} parent=11 // pred_fallthru
          _
        // Predicated region
        $region21: #{decoder_layer_forward.1} parent=11 // pred_check
          %p550 = pneg %p146
        $region22: #{decoder_layer_forward.1} parent=11 // pred_check_branch
          %552 = sbr.rel (%p550) target = $region24
        $region23: #{decoder_layer_forward.1} parent=11 // pred_region
          _
        $region24: #{decoder_layer_forward.1} parent=11 // pred_fallthru
          _
        // Predicated region
        $region25: #{decoder_layer_forward.1} parent=11 // pred_check
          %p553 = pneg %p167
        $region26: #{decoder_layer_forward.1} parent=11 // pred_check_branch
          %555 = sbr.rel (%p553) target = $region28
        $region27: #{decoder_layer_forward.1} parent=11 // pred_region
          _
        $region28: #{decoder_layer_forward.1} parent=11 // pred_fallthru
          _
        // Predicated region
        $region29: #{decoder_layer_forward.1} parent=11 // pred_check
          %p556 = pneg %p188
        $region30: #{decoder_layer_forward.1} parent=11 // pred_check_branch
          %558 = sbr.rel (%p556) target = $region32
        $region31: #{decoder_layer_forward.1} parent=11 // pred_region
          _
        $region32: #{decoder_layer_forward.1} parent=11 // pred_fallthru
          _
        // Predicated region
        $region33: #{decoder_layer_forward.1} parent=11 // pred_check
          %p559 = pneg %p209
        $region34: #{decoder_layer_forward.1} parent=11 // pred_check_branch
          %561 = sbr.rel (%p559) target = $region36
        $region35: #{decoder_layer_forward.1} parent=11 // pred_region
          _
        $region36: #{decoder_layer_forward.1} parent=11 // pred_fallthru
          _
        // Predicated region
        $region37: #{decoder_layer_forward.1} parent=11 // pred_check
          %p562 = pneg %p230
        $region38: #{decoder_layer_forward.1} parent=11 // pred_check_branch
          %564 = sbr.rel (%p562) target = $region40
        $region39: #{decoder_layer_forward.1} parent=11 // pred_region
          _
        $region40: #{decoder_layer_forward.1} parent=11 // pred_fallthru
          _
        // Predicated region
        $region41: #{decoder_layer_forward.1} parent=11 // pred_check
          %p565 = pneg %p251
        $region42: #{decoder_layer_forward.1} parent=11 // pred_check_branch
          %567 = sbr.rel (%p565) target = $region44
        $region43: #{decoder_layer_forward.1} parent=11 // pred_region
          _
        $region44: #{decoder_layer_forward.1} parent=11 // pred_fallthru
          _
        // Predicated region
        $region45: #{decoder_layer_forward.1} parent=11 // pred_check
          %p568 = pneg %p272
        $region46: #{decoder_layer_forward.1} parent=11 // pred_check_branch
          %570 = sbr.rel (%p568) target = $region48
        $region47: #{decoder_layer_forward.1} parent=11 // pred_region
          _
        $region48: #{decoder_layer_forward.1} parent=11 // pred_fallthru
          _
        // Predicated region
        $region49: #{decoder_layer_forward.1} parent=11 // pred_check
          %p571 = pneg %p293
        $region50: #{decoder_layer_forward.1} parent=11 // pred_check_branch
          %573 = sbr.rel (%p571) target = $region52
        $region51: #{decoder_layer_forward.1} parent=11 // pred_region
          _
        $region52: #{decoder_layer_forward.1} parent=11 // pred_fallthru
          _
        // Predicated region
        $region53: #{decoder_layer_forward.1} parent=11 // pred_check
          %p574 = pneg %p314
        $region54: #{decoder_layer_forward.1} parent=11 // pred_check_branch
          %576 = sbr.rel (%p574) target = $region56
        $region55: #{decoder_layer_forward.1} parent=11 // pred_region
          _
        $region56: #{decoder_layer_forward.1} parent=11 // pred_fallthru
          _
        // Predicated region
        $region57: #{decoder_layer_forward.1} parent=11 // pred_check
          %p577 = pneg %p335
        $region58: #{decoder_layer_forward.1} parent=11 // pred_check_branch
          %579 = sbr.rel (%p577) target = $region60
        $region59: #{decoder_layer_forward.1} parent=11 // pred_region
          _
        $region60: #{decoder_layer_forward.1} parent=11 // pred_fallthru
          _
        // Predicated region
        $region61: #{decoder_layer_forward.1} parent=11 // pred_check
          %p580 = pneg %p356
        $region62: #{decoder_layer_forward.1} parent=11 // pred_check_branch
          %582 = sbr.rel (%p580) target = $region64
        $region63: #{decoder_layer_forward.1} parent=11 // pred_region
          _
        $region64: #{decoder_layer_forward.1} parent=11 // pred_fallthru
          _
        // Predicated region
        $region65: #{decoder_layer_forward.1} parent=11 // pred_check
          %p583 = pneg %p377
        $region66: #{decoder_layer_forward.1} parent=11 // pred_check_branch
          %585 = sbr.rel (%p583) target = $region68
        $region67: #{decoder_layer_forward.1} parent=11 // pred_region
          _
        $region68: #{decoder_layer_forward.1} parent=11 // pred_fallthru
          _
        // Predicated region
        $region69: #{decoder_layer_forward.1} parent=11 // pred_check
          %p586 = pneg %p398
        $region70: #{decoder_layer_forward.1} parent=11 // pred_check_branch
          %588 = sbr.rel (%p586) target = $region72
        $region71: #{decoder_layer_forward.1} parent=11 // pred_region
          _
        $region72: #{decoder_layer_forward.1} parent=11 // pred_fallthru
          _
        // Predicated region
        $region73: #{decoder_layer_forward.1} parent=11 // pred_check
          %p589 = pneg %p419
        $region74: #{decoder_layer_forward.1} parent=11 // pred_check_branch
          %591 = sbr.rel (%p589) target = $region76
        $region75: #{decoder_layer_forward.1} parent=11 // pred_region
          _
        $region76: #{decoder_layer_forward.1} parent=11 // pred_fallthru
          _
        // Predicated region
        $region77: #{decoder_layer_forward.1} parent=11 // pred_check
          %p592 = pneg %p440
        $region78: #{decoder_layer_forward.1} parent=11 // pred_check_branch
          %594 = sbr.rel (%p592) target = $region80
        $region79: #{decoder_layer_forward.1} parent=11 // pred_region
          _
        $region80: #{decoder_layer_forward.1} parent=11 // pred_fallthru
          _
        // Predicated region
        $region81: #{decoder_layer_forward.1} parent=11 // pred_check
          %p595 = pneg %p461
        $region82: #{decoder_layer_forward.1} parent=11 // pred_check_branch
          %597 = sbr.rel (%p595) target = $region84
        $region83: #{decoder_layer_forward.1} parent=11 // pred_region
          _
        $region84: #{decoder_layer_forward.1} parent=11 // pred_fallthru
          _
        // Predicated region
        $region85: #{decoder_layer_forward.1} parent=11 // pred_check
          %p598 = pneg %p482
        $region86: #{decoder_layer_forward.1} parent=11 // pred_check_branch
          %600 = sbr.rel (%p598) target = $region88
        $region87: #{decoder_layer_forward.1} parent=11 // pred_region
          _
        $region88: #{decoder_layer_forward.1} parent=11 // pred_fallthru
          _
        // Predicated region
        $region89: #{decoder_layer_forward.1} parent=11 // pred_check
          %p601 = pneg %p503
        $region90: #{decoder_layer_forward.1} parent=11 // pred_check_branch
          %603 = sbr.rel (%p601) target = $region92
        $region91: #{decoder_layer_forward.1} parent=11 // pred_region
          _
        $region92: #{decoder_layer_forward.1} parent=11 // pred_fallthru
          _
      $region12: #{decoder_layer_forward.1} parent=5 // pred_fallthru
        _
      %p604 = scmp.lt.s32.totalorder %s31, 2
      // Predicated region
      $region93: #{decoder_layer_forward.1} parent=5 // pred_check
        %p605 = pneg %p604
      $region94: #{decoder_layer_forward.1} parent=5 // pred_check_branch
        %607 = sbr.rel (%p605) target = $region96
      $region95: #{decoder_layer_forward.1} parent=5 // pred_region
        // Predicated region
        $region97: #{decoder_layer_forward.1} parent=95 // pred_check
          %p608 = pneg %p51
        $region98: #{decoder_layer_forward.1} parent=95 // pred_check_branch
          %610 = sbr.rel (%p608) target = $region100
        $region99: #{decoder_layer_forward.1} parent=95 // pred_region
          %p611 = scmp.lt.s32.totalorder %s31, 1
          %s612 = scalar_select %p611, %s31, 1
          %s613 = smul.addr %s612, 8
          %s614 = scalar_lea.vmem %s0, %s613
        $region100: #{decoder_layer_forward.1} parent=95 // pred_fallthru
          _
        // Predicated region
        $region101: #{decoder_layer_forward.1} parent=95 // pred_check
          %p615 = pneg %p77
        $region102: #{decoder_layer_forward.1} parent=95 // pred_check_branch
          %617 = sbr.rel (%p615) target = $region104
        $region103: #{decoder_layer_forward.1} parent=95 // pred_region
          %p618 = scmp.lt.s32.totalorder %s31, 1
          %s619 = scalar_select %p618, %s31, 1
          %s620 = smul.addr %s619, 2
          %s621 = smul.addr %s620, 8
          %s622 = scalar_lea.vmem %s1, %s621
        $region104: #{decoder_layer_forward.1} parent=95 // pred_fallthru
          _
      $region96: #{decoder_layer_forward.1} parent=5 // pred_fallthru
        _
      %p623 = scmp.le.s32.totalorder 1, %s31
      %p624 = scmp.lt.s32.totalorder %s31, 3
      %p625 = pnand %p623, %p624
      %p626 = pneg %p625
      // Predicated region
      $region105: #{decoder_layer_forward.1} parent=5 // pred_check
        _
      $region106: #{decoder_layer_forward.1} parent=5 // pred_check_branch
        %628 = sbr.rel (%p625) target = $region108
      $region107: #{decoder_layer_forward.1} parent=5 // pred_region
        %s629 = ssub.s32 %s31, 1
        %p630 = scmp.lt.s32.totalorder %s36, 1
        %s631 = scalar_select %p630, %s36, 1
        %s632 = smul.addr %s631, 8
        %s633 = scalar_lea.vmem %s0, %s632
        %p634 = pneg %p57
        %p635 = pneg %p54
        %p636 = scmp.lt.s32.totalorder %s36, 1
        %s637 = scalar_select %p636, %s36, 1
        %s638 = smul.addr %s637, 2
        %s639 = smul.addr %s638, 8
        %s640 = scalar_lea.vmem %s1, %s639
        %p641 = pneg %p83
        %p642 = pneg %p80
        %p643 = pneg %p104
        %p644 = pneg %p101
        %p645 = pneg %p125
        %p646 = pneg %p122
        %p647 = pneg %p146
        %p648 = pneg %p143
        %p649 = pneg %p167
        %p650 = pneg %p164
        %p651 = pneg %p188
        %p652 = pneg %p185
        %p653 = pneg %p209
        %p654 = pneg %p206
        %p655 = pneg %p230
        %p656 = pneg %p227
        %p657 = pneg %p251
        %p658 = pneg %p248
        %p659 = pneg %p272
        %p660 = pneg %p269
        %p661 = pneg %p293
        %p662 = pneg %p290
        %p663 = pneg %p314
        %p664 = pneg %p311
        %p665 = pneg %p335
        %p666 = pneg %p332
        %p667 = pneg %p356
        %p668 = pneg %p353
        %p669 = pneg %p377
        %p670 = pneg %p374
        %p671 = pneg %p398
        %p672 = pneg %p395
        %p673 = pneg %p419
        %p674 = pneg %p416
        %p675 = pneg %p440
        %p676 = pneg %p437
        %p677 = pneg %p461
        %p678 = pneg %p458
        %p679 = pneg %p482
        %p680 = pneg %p479
        %p681 = pneg %p503
        %p682 = pneg %p500
        %p683 = pneg %p529
        %p684 = pneg %p526
        %s685 = sand.u32 %s516, 1
        %s686 = scalar_lea.sflag [#allocation3], %s685
        %s687 = sand.u32 %s516, 1
        %s688 = smul.addr %s687, 8
        %s689 = scalar_lea.vmem [#allocation2], %s688
        %p690 = scmp.lt.s32.totalorder %s36, 1
        %s691 = scalar_select %p690, %s36, 1
        %s692 = smul.addr %s691, 8
        %s693 = scalar_lea.vmem %s0, %s692
        %p694 = scmp.lt.s32.totalorder %s36, 1
        %s695 = scalar_select %p694, %s36, 1
        %s696 = smul.addr %s695, 2
        %s697 = smul.addr %s696, 8
        %s698 = scalar_lea.vmem %s1, %s697
        %v700 = vld [vmem:[%s693] sm:$0xff]
        %v701 = vld [vmem:[%s698] sm:$0xff]
        %v702 = vld [vmem:[%s698 + $0x8] sm:$0xf]
        %v703 = vpack.c.bf16 %v700, %v700
        %v704 = vld [vmem:[%s2] sm:$0xf]
        %v705 = vld [vmem:[%s2 + $0x4] sm:$0xf]
        %v706 = vld [vmem:[%s2 + $0x8] sm:$0xf]
        %v707 = vld [vmem:[%s2 + $0xc] sm:$0xf]
        %v708 = vld [vmem:[%s3] sm:$0x1]
        %v710 = vlaneseq
        %v711 = vshrl.u32 %v710, 7
        %v712 = vsub.s32 0, %v711
        %v713 = vrot.slane %v708, %v712
        %v719 = vunpack.c.l.b16 %v704
        %v720 = vunpack.c.l.b16 %v705
        %v721 = vunpack.c.l.b16 %v706
        %v722 = vunpack.c.l.b16 %v707
        %v723 = vpack.c.b16 %v720, %v719
        %v724 = vpack.c.b16 %v722, %v721
        %vm727 = vcmask 261120
        %v729 = vsel %vm727, %v703, 0
        %731 = vmatprep.subr.bf16.mxu0 0
        %732 = vmatpush1.bf16.msra.mxu0 %v723
        %733 = vmatprep.subr.bf16.mxu0 0
        %734 = vmatpush1.bf16.msra.mxu0 %v724
        %735 = vmatprep.subr.bf16.mxu0 0
        %736 = vmatpush1.bf16.msra.mxu0 0
        %737 = vmatprep.subr.bf16.mxu0 0
        %738 = vmatpush1.bf16.msra.mxu0 0
        %739 = vmatprep.subr.bf16.mxu0 0
        %740 = vmatpush1.bf16.msra.mxu0 0
        %741 = vmatprep.subr.bf16.mxu0 0
        %742 = vmatpush1.bf16.msra.mxu0 0
        %743 = vmatprep.subr.bf16.mxu0 0
        %744 = vmatpush1.bf16.msra.mxu0 0
        %745 = vmatprep.subr.bf16.mxu0 0
        %746 = vmatpush1.bf16.msra.mxu0 0
        %747 = vmatprep.subr.bf16.mxu0 0
        %748 = vmatpush1.bf16.msra.mxu0 0
        %749 = vmatprep.subr.bf16.mxu0 0
        %750 = vmatpush1.bf16.msra.mxu0 0
        %751 = vmatprep.subr.bf16.mxu0 0
        %752 = vmatpush1.bf16.msra.mxu0 0
        %753 = vmatprep.subr.bf16.mxu0 0
        %754 = vmatpush1.bf16.msra.mxu0 0
        %755 = vmatprep.subr.bf16.mxu0 0
        %756 = vmatpush1.bf16.msra.mxu0 0
        %757 = vmatprep.subr.bf16.mxu0 0
        %758 = vmatpush1.bf16.msra.mxu0 0
        %759 = vmatprep.subr.bf16.mxu0 0
        %760 = vmatpush1.bf16.msra.mxu0 0
        %761 = vmatprep.subr.bf16.mxu0 0
        %762 = vmatpush1.bf16.msra.mxu0 0
        %763 = vmatprep.mubr.bf16.mxu0 0
        %764 = vmatmul.mubr.bf16.gmra.mrb[0].mxu0 %v729
        %v765 = vpop.f32.mrb[0].mxu0
        %v766 = vadd.f32 %v713, %v765
        %v767 = vpop.f32.mrb[0].mxu0
        %v768 = vpop.f32.mrb[0].mxu0
        %v769 = vpop.f32.mrb[0].mxu0
        %770 = vdwg.mxu0
        %v771 = vmul.f32 %v766, 0.35355338
        %v772 = vlaneseq
        %v773 = vshrl.u32 %v772, 7
        %v774 = vlaneseq
        %v775 = vand.u32 %v774, 127
        %vm776 = vcmp.le.s32.totalorder %v775, %v773
        %v777 = vsel %vm776, 0.0, -1e+30
        %v778 = vpack.c.bf16 %v771, %v771
        %v779 = vpack.c.bf16 %v766, %v766
        %781 = vrot.lane.b32.xlu0 %v779, 96
        %v782 = vpop.permute.xlu0 %781
        %vm783 = vcmask 64512
        %v785 = vsel %vm783, %v778, 0
        %v788 = vsel %vm783, %v782, 0
        %790 = vmatprep.subr.bf16.mxu0 0
        %791 = vmatpush1.bf16.xpose.msra.mxu0 %v788
        %792 = vmatprep.subr.bf16.mxu0 0
        %793 = vmatpush1.bf16.xpose.msra.mxu0 0
        %794 = vmatprep.subr.bf16.mxu0 0
        %795 = vmatpush1.bf16.xpose.msra.mxu0 0
        %796 = vmatprep.subr.bf16.mxu0 0
        %797 = vmatpush1.bf16.xpose.msra.mxu0 0
        %798 = vmatprep.subr.bf16.mxu0 0
        %799 = vmatpush1.bf16.xpose.msra.mxu0 0
        %800 = vmatprep.subr.bf16.mxu0 0
        %801 = vmatpush1.bf16.xpose.msra.mxu0 0
        %802 = vmatprep.subr.bf16.mxu0 0
        %803 = vmatpush1.bf16.xpose.msra.mxu0 0
        %804 = vmatprep.subr.bf16.mxu0 0
        %805 = vmatpush1.bf16.xpose.msra.mxu0 0
        %806 = vmatprep.subr.bf16.mxu0 0
        %807 = vmatpush1.bf16.xpose.msra.mxu0 0
        %808 = vmatprep.subr.bf16.mxu0 0
        %809 = vmatpush1.bf16.xpose.msra.mxu0 0
        %810 = vmatprep.subr.bf16.mxu0 0
        %811 = vmatpush1.bf16.xpose.msra.mxu0 0
        %812 = vmatprep.subr.bf16.mxu0 0
        %813 = vmatpush1.bf16.xpose.msra.mxu0 0
        %814 = vmatprep.subr.bf16.mxu0 0
        %815 = vmatpush1.bf16.xpose.msra.mxu0 0
        %816 = vmatprep.subr.bf16.mxu0 0
        %817 = vmatpush1.bf16.xpose.msra.mxu0 0
        %818 = vmatprep.subr.bf16.mxu0 0
        %819 = vmatpush1.bf16.xpose.msra.mxu0 0
        %820 = vmatprep.subr.bf16.mxu0 0
        %821 = vmatpush1.bf16.xpose.msra.mxu0 0
        %822 = vmatprep.mubr.bf16.mxu0 0
        %823 = vmatmul.mubr.bf16.gmra.mrb[0].mxu0 %v785
        %v824 = vpop.f32.mrb[0].mxu0
        %v825 = vadd.f32 %v777, %v824
        %v826 = vpop.f32.mrb[0].mxu0
        %v827 = vpop.f32.mrb[0].mxu0
        %v828 = vpop.f32.mrb[0].mxu0
        %829 = vdwg.mxu0
        %v830 = vsel %vm783, %v825, -inf
        %831 = vmax.xlane.f32.xlu0 %v830
        %v832 = vpop.xlane.xlu0 %831
        %v833 = vsub.f32 %v825, %v832
        %v834 = vmul.f32 %v833, 1.442695
        %v835 = vpow.pop %v834
        %v836 = vsel %vm783, %v835, 0.0
        %837 = vadd.xlane.f32.xlu0 %v836
        %v838 = vpop.xlane.xlu0 %837
        %v839 = vrcp.pop %v838
        %v840 = vmul.f32 %v835, %v839
        %v841 = vpack.c.bf16 %v840, %v840
        %842 = vrot.lane.b32.xlu0 %v779, 64
        %v843 = vpop.permute.xlu0 %842
        %v845 = vsel %vm783, %v841, 0
        %vm847 = vcmask 1043456
        %v849 = vsel %vm847, %v843, 0
        %851 = vmatprep.subr.bf16.mxu0 0
        %852 = vmatpush1.bf16.msra.mxu0 %v849
        %853 = vmatprep.subr.bf16.mxu0 0
        %854 = vmatpush1.bf16.msra.mxu0 0
        %855 = vmatprep.subr.bf16.mxu0 0
        %856 = vmatpush1.bf16.msra.mxu0 0
        %857 = vmatprep.subr.bf16.mxu0 0
        %858 = vmatpush1.bf16.msra.mxu0 0
        %859 = vmatprep.subr.bf16.mxu0 0
        %860 = vmatpush1.bf16.msra.mxu0 0
        %861 = vmatprep.subr.bf16.mxu0 0
        %862 = vmatpush1.bf16.msra.mxu0 0
        %863 = vmatprep.subr.bf16.mxu0 0
        %864 = vmatpush1.bf16.msra.mxu0 0
        %865 = vmatprep.subr.bf16.mxu0 0
        %866 = vmatpush1.bf16.msra.mxu0 0
        %867 = vmatprep.subr.bf16.mxu0 0
        %868 = vmatpush1.bf16.msra.mxu0 0
        %869 = vmatprep.subr.bf16.mxu0 0
        %870 = vmatpush1.bf16.msra.mxu0 0
        %871 = vmatprep.subr.bf16.mxu0 0
        %872 = vmatpush1.bf16.msra.mxu0 0
        %873 = vmatprep.subr.bf16.mxu0 0
        %874 = vmatpush1.bf16.msra.mxu0 0
        %875 = vmatprep.subr.bf16.mxu0 0
        %876 = vmatpush1.bf16.msra.mxu0 0
        %877 = vmatprep.subr.bf16.mxu0 0
        %878 = vmatpush1.bf16.msra.mxu0 0
        %879 = vmatprep.subr.bf16.mxu0 0
        %880 = vmatpush1.bf16.msra.mxu0 0
        %881 = vmatprep.subr.bf16.mxu0 0
        %882 = vmatpush1.bf16.msra.mxu0 0
        %883 = vmatprep.mubr.bf16.mxu0 0
        %884 = vmatmul.mubr.bf16.gmra.mrb[0].mxu0 %v845
        %v885 = vpop.f32.mrb[0].mxu0
        %v886 = vadd.f32 0.0, %v885
        %v887 = vpop.f32.mrb[0].mxu0
        %v888 = vpop.f32.mrb[0].mxu0
        %v889 = vpop.f32.mrb[0].mxu0
        %890 = vdwg.mxu0
        %892 = vrot.lane.b32.xlu0 %v778, 120
        %v893 = vpop.permute.xlu0 %892
        %894 = vrot.lane.b32.xlu0 %v779, 88
        %v895 = vpop.permute.xlu0 %894
        %v897 = vsel %vm783, %v893, 0
        %v900 = vsel %vm783, %v895, 0
        %902 = vmatprep.subr.bf16.mxu0 0
        %903 = vmatpush1.bf16.xpose.msra.mxu0 %v900
        %904 = vmatprep.subr.bf16.mxu0 0
        %905 = vmatpush1.bf16.xpose.msra.mxu0 0
        %906 = vmatprep.subr.bf16.mxu0 0
        %907 = vmatpush1.bf16.xpose.msra.mxu0 0
        %908 = vmatprep.subr.bf16.mxu0 0
        %909 = vmatpush1.bf16.xpose.msra.mxu0 0
        %910 = vmatprep.subr.bf16.mxu0 0
        %911 = vmatpush1.bf16.xpose.msra.mxu0 0
        %912 = vmatprep.subr.bf16.mxu0 0
        %913 = vmatpush1.bf16.xpose.msra.mxu0 0
        %914 = vmatprep.subr.bf16.mxu0 0
        %915 = vmatpush1.bf16.xpose.msra.mxu0 0
        %916 = vmatprep.subr.bf16.mxu0 0
        %917 = vmatpush1.bf16.xpose.msra.mxu0 0
        %918 = vmatprep.subr.bf16.mxu0 0
        %919 = vmatpush1.bf16.xpose.msra.mxu0 0
        %920 = vmatprep.subr.bf16.mxu0 0
        %921 = vmatpush1.bf16.xpose.msra.mxu0 0
        %922 = vmatprep.subr.bf16.mxu0 0
        %923 = vmatpush1.bf16.xpose.msra.mxu0 0
        %924 = vmatprep.subr.bf16.mxu0 0
        %925 = vmatpush1.bf16.xpose.msra.mxu0 0
        %926 = vmatprep.subr.bf16.mxu0 0
        %927 = vmatpush1.bf16.xpose.msra.mxu0 0
        %928 = vmatprep.subr.bf16.mxu0 0
        %929 = vmatpush1.bf16.xpose.msra.mxu0 0
        %930 = vmatprep.subr.bf16.mxu0 0
        %931 = vmatpush1.bf16.xpose.msra.mxu0 0
        %932 = vmatprep.subr.bf16.mxu0 0
        %933 = vmatpush1.bf16.xpose.msra.mxu0 0
        %934 = vmatprep.mubr.bf16.mxu0 0
        %935 = vmatmul.mubr.bf16.gmra.mrb[0].mxu0 %v897
        %v936 = vpop.f32.mrb[0].mxu0
        %v937 = vadd.f32 %v777, %v936
        %v938 = vpop.f32.mrb[0].mxu0
        %v939 = vpop.f32.mrb[0].mxu0
        %v940 = vpop.f32.mrb[0].mxu0
        %941 = vdwg.mxu0
        %v942 = vsel %vm783, %v937, -inf
        %943 = vmax.xlane.f32.xlu0 %v942
        %v944 = vpop.xlane.xlu0 %943
        %v945 = vsub.f32 %v937, %v944
        %v946 = vmul.f32 %v945, 1.442695
        %v947 = vpow.pop %v946
        %v948 = vsel %vm783, %v947, 0.0
        %949 = vadd.xlane.f32.xlu0 %v948
        %v950 = vpop.xlane.xlu0 %949
        %v951 = vrcp.pop %v950
        %v952 = vmul.f32 %v947, %v951
        %v953 = vpack.c.bf16 %v952, %v952
        %954 = vrot.lane.b32.xlu0 %v779, 56
        %v955 = vpop.permute.xlu0 %954
        %v957 = vsel %vm783, %v953, 0
        %v960 = vsel %vm847, %v955, 0
        %962 = vmatprep.subr.bf16.mxu0 0
        %963 = vmatpush1.bf16.msra.mxu0 %v960
        %964 = vmatprep.subr.bf16.mxu0 0
        %965 = vmatpush1.bf16.msra.mxu0 0
        %966 = vmatprep.subr.bf16.mxu0 0
        %967 = vmatpush1.bf16.msra.mxu0 0
        %968 = vmatprep.subr.bf16.mxu0 0
        %969 = vmatpush1.bf16.msra.mxu0 0
        %970 = vmatprep.subr.bf16.mxu0 0
        %971 = vmatpush1.bf16.msra.mxu0 0
        %972 = vmatprep.subr.bf16.mxu0 0
        %973 = vmatpush1.bf16.msra.mxu0 0
        %974 = vmatprep.subr.bf16.mxu0 0
        %975 = vmatpush1.bf16.msra.mxu0 0
        %976 = vmatprep.subr.bf16.mxu0 0
        %977 = vmatpush1.bf16.msra.mxu0 0
        %978 = vmatprep.subr.bf16.mxu0 0
        %979 = vmatpush1.bf16.msra.mxu0 0
        %980 = vmatprep.subr.bf16.mxu0 0
        %981 = vmatpush1.bf16.msra.mxu0 0
        %982 = vmatprep.subr.bf16.mxu0 0
        %983 = vmatpush1.bf16.msra.mxu0 0
        %984 = vmatprep.subr.bf16.mxu0 0
        %985 = vmatpush1.bf16.msra.mxu0 0
        %986 = vmatprep.subr.bf16.mxu0 0
        %987 = vmatpush1.bf16.msra.mxu0 0
        %988 = vmatprep.subr.bf16.mxu0 0
        %989 = vmatpush1.bf16.msra.mxu0 0
        %990 = vmatprep.subr.bf16.mxu0 0
        %991 = vmatpush1.bf16.msra.mxu0 0
        %992 = vmatprep.subr.bf16.mxu0 0
        %993 = vmatpush1.bf16.msra.mxu0 0
        %994 = vmatprep.mubr.bf16.mxu0 0
        %995 = vmatmul.mubr.bf16.gmra.mrb[0].mxu0 %v957
        %v996 = vpop.f32.mrb[0].mxu0
        %v997 = vadd.f32 0.0, %v996
        %v998 = vpop.f32.mrb[0].mxu0
        %v999 = vpop.f32.mrb[0].mxu0
        %v1000 = vpop.f32.mrb[0].mxu0
        %1001 = vdwg.mxu0
        %1002 = vrot.lane.b32.xlu0 %v778, 112
        %v1003 = vpop.permute.xlu0 %1002
        %1004 = vrot.lane.b32.xlu0 %v779, 80
        %v1005 = vpop.permute.xlu0 %1004
        %v1007 = vsel %vm783, %v1003, 0
        %v1010 = vsel %vm783, %v1005, 0
        %1012 = vmatprep.subr.bf16.mxu0 0
        %1013 = vmatpush1.bf16.xpose.msra.mxu0 %v1010
        %1014 = vmatprep.subr.bf16.mxu0 0
        %1015 = vmatpush1.bf16.xpose.msra.mxu0 0
        %1016 = vmatprep.subr.bf16.mxu0 0
        %1017 = vmatpush1.bf16.xpose.msra.mxu0 0
        %1018 = vmatprep.subr.bf16.mxu0 0
        %1019 = vmatpush1.bf16.xpose.msra.mxu0 0
        %1020 = vmatprep.subr.bf16.mxu0 0
        %1021 = vmatpush1.bf16.xpose.msra.mxu0 0
        %1022 = vmatprep.subr.bf16.mxu0 0
        %1023 = vmatpush1.bf16.xpose.msra.mxu0 0
        %1024 = vmatprep.subr.bf16.mxu0 0
        %1025 = vmatpush1.bf16.xpose.msra.mxu0 0
        %1026 = vmatprep.subr.bf16.mxu0 0
        %1027 = vmatpush1.bf16.xpose.msra.mxu0 0
        %1028 = vmatprep.subr.bf16.mxu0 0
        %1029 = vmatpush1.bf16.xpose.msra.mxu0 0
        %1030 = vmatprep.subr.bf16.mxu0 0
        %1031 = vmatpush1.bf16.xpose.msra.mxu0 0
        %1032 = vmatprep.subr.bf16.mxu0 0
        %1033 = vmatpush1.bf16.xpose.msra.mxu0 0
        %1034 = vmatprep.subr.bf16.mxu0 0
        %1035 = vmatpush1.bf16.xpose.msra.mxu0 0
        %1036 = vmatprep.subr.bf16.mxu0 0
        %1037 = vmatpush1.bf16.xpose.msra.mxu0 0
        %1038 = vmatprep.subr.bf16.mxu0 0
        %1039 = vmatpush1.bf16.xpose.msra.mxu0 0
        %1040 = vmatprep.subr.bf16.mxu0 0
        %1041 = vmatpush1.bf16.xpose.msra.mxu0 0
        %1042 = vmatprep.subr.bf16.mxu0 0
        %1043 = vmatpush1.bf16.xpose.msra.mxu0 0
        %1044 = vmatprep.mubr.bf16.mxu0 0
        %1045 = vmatmul.mubr.bf16.gmra.mrb[0].mxu0 %v1007
        %v1046 = vpop.f32.mrb[0].mxu0
        %v1047 = vadd.f32 %v777, %v1046
        %v1048 = vpop.f32.mrb[0].mxu0
        %v1049 = vpop.f32.mrb[0].mxu0
        %v1050 = vpop.f32.mrb[0].mxu0
        %1051 = vdwg.mxu0
        %v1052 = vsel %vm783, %v1047, -inf
        %1053 = vmax.xlane.f32.xlu0 %v1052
        %v1054 = vpop.xlane.xlu0 %1053
        %v1055 = vsub.f32 %v1047, %v1054
        %v1056 = vmul.f32 %v1055, 1.442695
        %v1057 = vpow.pop %v1056
        %v1058 = vsel %vm783, %v1057, 0.0
        %1059 = vadd.xlane.f32.xlu0 %v1058
        %v1060 = vpop.xlane.xlu0 %1059
        %v1061 = vrcp.pop %v1060
        %v1062 = vmul.f32 %v1057, %v1061
        %v1063 = vpack.c.bf16 %v1062, %v1062
        %1064 = vrot.lane.b32.xlu0 %v779, 48
        %v1065 = vpop.permute.xlu0 %1064
        %v1067 = vsel %vm783, %v1063, 0
        %v1070 = vsel %vm847, %v1065, 0
        %1072 = vmatprep.subr.bf16.mxu0 0
        %1073 = vmatpush1.bf16.msra.mxu0 %v1070
        %1074 = vmatprep.subr.bf16.mxu0 0
        %1075 = vmatpush1.bf16.msra.mxu0 0
        %1076 = vmatprep.subr.bf16.mxu0 0
        %1077 = vmatpush1.bf16.msra.mxu0 0
        %1078 = vmatprep.subr.bf16.mxu0 0
        %1079 = vmatpush1.bf16.msra.mxu0 0
        %1080 = vmatprep.subr.bf16.mxu0 0
        %1081 = vmatpush1.bf16.msra.mxu0 0
        %1082 = vmatprep.subr.bf16.mxu0 0
        %1083 = vmatpush1.bf16.msra.mxu0 0
        %1084 = vmatprep.subr.bf16.mxu0 0
        %1085 = vmatpush1.bf16.msra.mxu0 0
        %1086 = vmatprep.subr.bf16.mxu0 0
        %1087 = vmatpush1.bf16.msra.mxu0 0
        %1088 = vmatprep.subr.bf16.mxu0 0
        %1089 = vmatpush1.bf16.msra.mxu0 0
        %1090 = vmatprep.subr.bf16.mxu0 0
        %1091 = vmatpush1.bf16.msra.mxu0 0
        %1092 = vmatprep.subr.bf16.mxu0 0
        %1093 = vmatpush1.bf16.msra.mxu0 0
        %1094 = vmatprep.subr.bf16.mxu0 0
        %1095 = vmatpush1.bf16.msra.mxu0 0
        %1096 = vmatprep.subr.bf16.mxu0 0
        %1097 = vmatpush1.bf16.msra.mxu0 0
        %1098 = vmatprep.subr.bf16.mxu0 0
        %1099 = vmatpush1.bf16.msra.mxu0 0
        %1100 = vmatprep.subr.bf16.mxu0 0
        %1101 = vmatpush1.bf16.msra.mxu0 0
        %1102 = vmatprep.subr.bf16.mxu0 0
        %1103 = vmatpush1.bf16.msra.mxu0 0
        %1104 = vmatprep.mubr.bf16.mxu0 0
        %1105 = vmatmul.mubr.bf16.gmra.mrb[0].mxu0 %v1067
        %v1106 = vpop.f32.mrb[0].mxu0
        %v1107 = vadd.f32 0.0, %v1106
        %v1108 = vpop.f32.mrb[0].mxu0
        %v1109 = vpop.f32.mrb[0].mxu0
        %v1110 = vpop.f32.mrb[0].mxu0
        %1111 = vdwg.mxu0
        %1112 = vrot.lane.b32.xlu0 %v778, 104
        %v1113 = vpop.permute.xlu0 %1112
        %1114 = vrot.lane.b32.xlu0 %v779, 72
        %v1115 = vpop.permute.xlu0 %1114
        %v1117 = vsel %vm783, %v1113, 0
        %v1120 = vsel %vm783, %v1115, 0
        %1122 = vmatprep.subr.bf16.mxu0 0
        %1123 = vmatpush1.bf16.xpose.msra.mxu0 %v1120
        %1124 = vmatprep.subr.bf16.mxu0 0
        %1125 = vmatpush1.bf16.xpose.msra.mxu0 0
        %1126 = vmatprep.subr.bf16.mxu0 0
        %1127 = vmatpush1.bf16.xpose.msra.mxu0 0
        %1128 = vmatprep.subr.bf16.mxu0 0
        %1129 = vmatpush1.bf16.xpose.msra.mxu0 0
        %1130 = vmatprep.subr.bf16.mxu0 0
        %1131 = vmatpush1.bf16.xpose.msra.mxu0 0
        %1132 = vmatprep.subr.bf16.mxu0 0
        %1133 = vmatpush1.bf16.xpose.msra.mxu0 0
        %1134 = vmatprep.subr.bf16.mxu0 0
        %1135 = vmatpush1.bf16.xpose.msra.mxu0 0
        %1136 = vmatprep.subr.bf16.mxu0 0
        %1137 = vmatpush1.bf16.xpose.msra.mxu0 0
        %1138 = vmatprep.subr.bf16.mxu0 0
        %1139 = vmatpush1.bf16.xpose.msra.mxu0 0
        %1140 = vmatprep.subr.bf16.mxu0 0
        %1141 = vmatpush1.bf16.xpose.msra.mxu0 0
        %1142 = vmatprep.subr.bf16.mxu0 0
        %1143 = vmatpush1.bf16.xpose.msra.mxu0 0
        %1144 = vmatprep.subr.bf16.mxu0 0
        %1145 = vmatpush1.bf16.xpose.msra.mxu0 0
        %1146 = vmatprep.subr.bf16.mxu0 0
        %1147 = vmatpush1.bf16.xpose.msra.mxu0 0
        %1148 = vmatprep.subr.bf16.mxu0 0
        %1149 = vmatpush1.bf16.xpose.msra.mxu0 0
        %1150 = vmatprep.subr.bf16.mxu0 0
        %1151 = vmatpush1.bf16.xpose.msra.mxu0 0
        %1152 = vmatprep.subr.bf16.mxu0 0
        %1153 = vmatpush1.bf16.xpose.msra.mxu0 0
        %1154 = vmatprep.mubr.bf16.mxu0 0
        %1155 = vmatmul.mubr.bf16.gmra.mrb[0].mxu0 %v1117
        %v1156 = vpop.f32.mrb[0].mxu0
        %v1157 = vadd.f32 %v777, %v1156
        %v1158 = vpop.f32.mrb[0].mxu0
        %v1159 = vpop.f32.mrb[0].mxu0
        %v1160 = vpop.f32.mrb[0].mxu0
        %1161 = vdwg.mxu0
        %v1162 = vsel %vm783, %v1157, -inf
        %1163 = vmax.xlane.f32.xlu0 %v1162
        %v1164 = vpop.xlane.xlu0 %1163
        %v1165 = vsub.f32 %v1157, %v1164
        %v1166 = vmul.f32 %v1165, 1.442695
        %v1167 = vpow.pop %v1166
        %v1168 = vsel %vm783, %v1167, 0.0
        %1169 = vadd.xlane.f32.xlu0 %v1168
        %v1170 = vpop.xlane.xlu0 %1169
        %v1171 = vrcp.pop %v1170
        %v1172 = vmul.f32 %v1167, %v1171
        %v1173 = vpack.c.bf16 %v1172, %v1172
        %1174 = vrot.lane.b32.xlu0 %v779, 40
        %v1175 = vpop.permute.xlu0 %1174
        %v1177 = vsel %vm783, %v1173, 0
        %v1180 = vsel %vm847, %v1175, 0
        %1182 = vmatprep.subr.bf16.mxu0 0
        %1183 = vmatpush1.bf16.msra.mxu0 %v1180
        %1184 = vmatprep.subr.bf16.mxu0 0
        %1185 = vmatpush1.bf16.msra.mxu0 0
        %1186 = vmatprep.subr.bf16.mxu0 0
        %1187 = vmatpush1.bf16.msra.mxu0 0
        %1188 = vmatprep.subr.bf16.mxu0 0
        %1189 = vmatpush1.bf16.msra.mxu0 0
        %1190 = vmatprep.subr.bf16.mxu0 0
        %1191 = vmatpush1.bf16.msra.mxu0 0
        %1192 = vmatprep.subr.bf16.mxu0 0
        %1193 = vmatpush1.bf16.msra.mxu0 0
        %1194 = vmatprep.subr.bf16.mxu0 0
        %1195 = vmatpush1.bf16.msra.mxu0 0
        %1196 = vmatprep.subr.bf16.mxu0 0
        %1197 = vmatpush1.bf16.msra.mxu0 0
        %1198 = vmatprep.subr.bf16.mxu0 0
        %1199 = vmatpush1.bf16.msra.mxu0 0
        %1200 = vmatprep.subr.bf16.mxu0 0
        %1201 = vmatpush1.bf16.msra.mxu0 0
        %1202 = vmatprep.subr.bf16.mxu0 0
        %1203 = vmatpush1.bf16.msra.mxu0 0
        %1204 = vmatprep.subr.bf16.mxu0 0
        %1205 = vmatpush1.bf16.msra.mxu0 0
        %1206 = vmatprep.subr.bf16.mxu0 0
        %1207 = vmatpush1.bf16.msra.mxu0 0
        %1208 = vmatprep.subr.bf16.mxu0 0
        %1209 = vmatpush1.bf16.msra.mxu0 0
        %1210 = vmatprep.subr.bf16.mxu0 0
        %1211 = vmatpush1.bf16.msra.mxu0 0
        %1212 = vmatprep.subr.bf16.mxu0 0
        %1213 = vmatpush1.bf16.msra.mxu0 0
        %1214 = vmatprep.mubr.bf16.mxu0 0
        %1215 = vmatmul.mubr.bf16.gmra.mrb[0].mxu0 %v1177
        %v1216 = vpop.f32.mrb[0].mxu0
        %v1217 = vadd.f32 0.0, %v1216
        %v1218 = vpop.f32.mrb[0].mxu0
        %v1219 = vpop.f32.mrb[0].mxu0
        %v1220 = vpop.f32.mrb[0].mxu0
        %1221 = vdwg.mxu0
        %1223 = vrot.lane.b32.xlu0 %v997, 8
        %v1224 = vpop.permute.xlu0 %1223
        %1227 = vrot.lane.b32.xlu0 %v1107, 16
        %v1228 = vpop.permute.xlu0 %1227
        %1231 = vrot.lane.b32.xlu0 %v1217, 24
        %v1232 = vpop.permute.xlu0 %1231
        %v1234 = vsel %vm783, %v886, %v1224
        %vm1235 = vcmask 130048
        %v1236 = vsel %vm1235, %v1234, %v1228
        %vm1237 = vcmask 195584
        %v1238 = vsel %vm1237, %v1236, %v1232
        %v1239 = vpack.c.bf16 %v1238, %v1238
        %v1240 = vld [vmem:[%s4] sm:$0xf]
        %v1241 = vld [vmem:[%s4 + $0x4] sm:$0xf]
        %v1242 = vld [vmem:[%s4 + $0x8] sm:$0xf]
        %v1243 = vld [vmem:[%s4 + $0xc] sm:$0xf]
        %v1244 = vld [vmem:[%s5] sm:$0x1]
        %v1246 = vlaneseq
        %v1247 = vshrl.u32 %v1246, 7
        %v1248 = vsub.s32 0, %v1247
        %v1249 = vrot.slane %v1244, %v1248
        %v1255 = vunpack.c.l.b16 %v1240
        %v1256 = vunpack.c.l.b16 %v1241
        %v1257 = vunpack.c.l.b16 %v1242
        %v1258 = vunpack.c.l.b16 %v1243
        %v1259 = vpack.c.b16 %v1256, %v1255
        %v1260 = vpack.c.b16 %v1258, %v1257
        %v1264 = vsel %vm727, %v1239, 0
        %1266 = vmatprep.subr.bf16.mxu0 0
        %1267 = vmatpush1.bf16.msra.mxu0 %v1259
        %1268 = vmatprep.subr.bf16.mxu0 0
        %1269 = vmatpush1.bf16.msra.mxu0 %v1260
        %1270 = vmatprep.subr.bf16.mxu0 0
        %1271 = vmatpush1.bf16.msra.mxu0 0
        %1272 = vmatprep.subr.bf16.mxu0 0
        %1273 = vmatpush1.bf16.msra.mxu0 0
        %1274 = vmatprep.subr.bf16.mxu0 0
        %1275 = vmatpush1.bf16.msra.mxu0 0
        %1276 = vmatprep.subr.bf16.mxu0 0
        %1277 = vmatpush1.bf16.msra.mxu0 0
        %1278 = vmatprep.subr.bf16.mxu0 0
        %1279 = vmatpush1.bf16.msra.mxu0 0
        %1280 = vmatprep.subr.bf16.mxu0 0
        %1281 = vmatpush1.bf16.msra.mxu0 0
        %1282 = vmatprep.subr.bf16.mxu0 0
        %1283 = vmatpush1.bf16.msra.mxu0 0
        %1284 = vmatprep.subr.bf16.mxu0 0
        %1285 = vmatpush1.bf16.msra.mxu0 0
        %1286 = vmatprep.subr.bf16.mxu0 0
        %1287 = vmatpush1.bf16.msra.mxu0 0
        %1288 = vmatprep.subr.bf16.mxu0 0
        %1289 = vmatpush1.bf16.msra.mxu0 0
        %1290 = vmatprep.subr.bf16.mxu0 0
        %1291 = vmatpush1.bf16.msra.mxu0 0
        %1292 = vmatprep.subr.bf16.mxu0 0
        %1293 = vmatpush1.bf16.msra.mxu0 0
        %1294 = vmatprep.subr.bf16.mxu0 0
        %1295 = vmatpush1.bf16.msra.mxu0 0
        %1296 = vmatprep.subr.bf16.mxu0 0
        %1297 = vmatpush1.bf16.msra.mxu0 0
        %1298 = vmatprep.mubr.bf16.mxu0 0
        %1299 = vmatmul.mubr.bf16.gmra.mrb[0].mxu0 %v1264
        %v1300 = vpop.f32.mrb[0].mxu0
        %v1301 = vadd.f32 %v1249, %v1300
        %v1302 = vpop.f32.mrb[0].mxu0
        %v1303 = vpop.f32.mrb[0].mxu0
        %v1304 = vpop.f32.mrb[0].mxu0
        %1305 = vdwg.mxu0
        %v1306 = vadd.f32 %v700, %v1301
        %v1307 = vld [vmem:[%s12] sm:$0x1]
        %v1308 = vld [vmem:[%s13] sm:$0x1]
        %v1309 = vsel %vm727, %v1306, 0.0
        %1310 = vadd.xlane.f32.xlu0 %v1309
        %v1311 = vpop.xlane.xlu0 %1310
        %v1312 = vrcp.pop 32.0
        %v1313 = vmul.f32 %v1311, %v1312
        %v1314 = vsub.f32 %v1306, %v1313
        %v1315 = vmul.f32 %v1314, %v1314
        %v1316 = vsel %vm727, %v1315, 0.0
        %1317 = vadd.xlane.f32.xlu0 %v1316
        %v1318 = vpop.xlane.xlu0 %1317
        %v1319 = vmul.f32 %v1318, %v1312
        %v1320 = vadd.f32 %v1319, 1e-05
        %v1321 = vrsqrt.pop %v1320
        %v1322 = vmul.f32 %v1314, %v1321
        %v1324 = vlaneseq
        %v1325 = vshrl.u32 %v1324, 7
        %v1326 = vsub.s32 0, %v1325
        %v1327 = vrot.slane %v1307, %v1326
        %v1329 = vmul.f32 %v1322, %v1327
        %v1331 = vlaneseq
        %v1332 = vshrl.u32 %v1331, 7
        %v1333 = vsub.s32 0, %v1332
        %v1334 = vrot.slane %v1308, %v1333
        %v1336 = vadd.f32 %v1329, %v1334
        %v1337 = vpack.c.bf16 %v1336, %v1336
        %v1338 = vld [vmem:[%s6] sm:$0xf]
        %v1339 = vld [vmem:[%s6 + $0x4] sm:$0xf]
        %v1340 = vld [vmem:[%s6 + $0x8] sm:$0xf]
        %v1341 = vld [vmem:[%s6 + $0xc] sm:$0xf]
        %v1342 = vld [vmem:[%s7] sm:$0x1]
        %v1344 = vlaneseq
        %v1345 = vshrl.u32 %v1344, 7
        %v1346 = vsub.s32 0, %v1345
        %v1347 = vrot.slane %v1342, %v1346
        %v1353 = vunpack.c.l.b16 %v1338
        %v1354 = vunpack.c.l.b16 %v1339
        %v1355 = vunpack.c.l.b16 %v1340
        %v1356 = vunpack.c.l.b16 %v1341
        %v1357 = vpack.c.b16 %v1354, %v1353
        %v1358 = vpack.c.b16 %v1356, %v1355
        %v1362 = vsel %vm727, %v1337, 0
        %1364 = vmatprep.subr.bf16.mxu0 0
        %1365 = vmatpush1.bf16.msra.mxu0 %v1357
        %1366 = vmatprep.subr.bf16.mxu0 0
        %1367 = vmatpush1.bf16.msra.mxu0 %v1358
        %1368 = vmatprep.subr.bf16.mxu0 0
        %1369 = vmatpush1.bf16.msra.mxu0 0
        %1370 = vmatprep.subr.bf16.mxu0 0
        %1371 = vmatpush1.bf16.msra.mxu0 0
        %1372 = vmatprep.subr.bf16.mxu0 0
        %1373 = vmatpush1.bf16.msra.mxu0 0
        %1374 = vmatprep.subr.bf16.mxu0 0
        %1375 = vmatpush1.bf16.msra.mxu0 0
        %1376 = vmatprep.subr.bf16.mxu0 0
        %1377 = vmatpush1.bf16.msra.mxu0 0
        %1378 = vmatprep.subr.bf16.mxu0 0
        %1379 = vmatpush1.bf16.msra.mxu0 0
        %1380 = vmatprep.subr.bf16.mxu0 0
        %1381 = vmatpush1.bf16.msra.mxu0 0
        %1382 = vmatprep.subr.bf16.mxu0 0
        %1383 = vmatpush1.bf16.msra.mxu0 0
        %1384 = vmatprep.subr.bf16.mxu0 0
        %1385 = vmatpush1.bf16.msra.mxu0 0
        %1386 = vmatprep.subr.bf16.mxu0 0
        %1387 = vmatpush1.bf16.msra.mxu0 0
        %1388 = vmatprep.subr.bf16.mxu0 0
        %1389 = vmatpush1.bf16.msra.mxu0 0
        %1390 = vmatprep.subr.bf16.mxu0 0
        %1391 = vmatpush1.bf16.msra.mxu0 0
        %1392 = vmatprep.subr.bf16.mxu0 0
        %1393 = vmatpush1.bf16.msra.mxu0 0
        %1394 = vmatprep.subr.bf16.mxu0 0
        %1395 = vmatpush1.bf16.msra.mxu0 0
        %1396 = vmatprep.mubr.bf16.mxu0 0
        %1397 = vmatmul.mubr.bf16.gmra.mrb[0].mxu0 %v1362
        %v1398 = vpop.f32.mrb[0].mxu0
        %v1399 = vadd.f32 %v1347, %v1398
        %v1400 = vpop.f32.mrb[0].mxu0
        %v1401 = vpop.f32.mrb[0].mxu0
        %v1402 = vpop.f32.mrb[0].mxu0
        %1403 = vdwg.mxu0
        %v1404 = vpack.c.bf16 %v702, %v701
        %v1405 = vld [vmem:[%s8] sm:$0xf]
        %v1406 = vld [vmem:[%s8 + $0x4] sm:$0xf]
        %v1407 = vld [vmem:[%s8 + $0x8] sm:$0xf]
        %v1408 = vld [vmem:[%s8 + $0xc] sm:$0xf]
        %v1409 = vld [vmem:[%s9] sm:$0x1]
        %v1411 = vlaneseq
        %v1412 = vshrl.u32 %v1411, 7
        %v1413 = vsub.s32 0, %v1412
        %v1414 = vrot.slane %v1409, %v1413
        %v1420 = vunpack.c.l.b16 %v1405
        %v1421 = vunpack.c.l.b16 %v1406
        %v1422 = vunpack.c.l.b16 %v1407
        %v1423 = vunpack.c.l.b16 %v1408
        %v1424 = vpack.c.b16 %v1421, %v1420
        %v1425 = vpack.c.b16 %v1423, %v1422
        %v1429 = vsel %vm727, %v1404, 0
        %1431 = vmatprep.subr.bf16.mxu0 0
        %1432 = vmatpush1.bf16.msra.mxu0 %v1424
        %1433 = vmatprep.subr.bf16.mxu0 0
        %1434 = vmatpush1.bf16.msra.mxu0 %v1425
        %1435 = vmatprep.subr.bf16.mxu0 0
        %1436 = vmatpush1.bf16.msra.mxu0 0
        %1437 = vmatprep.subr.bf16.mxu0 0
        %1438 = vmatpush1.bf16.msra.mxu0 0
        %1439 = vmatprep.subr.bf16.mxu0 0
        %1440 = vmatpush1.bf16.msra.mxu0 0
        %1441 = vmatprep.subr.bf16.mxu0 0
        %1442 = vmatpush1.bf16.msra.mxu0 0
        %1443 = vmatprep.subr.bf16.mxu0 0
        %1444 = vmatpush1.bf16.msra.mxu0 0
        %1445 = vmatprep.subr.bf16.mxu0 0
        %1446 = vmatpush1.bf16.msra.mxu0 0
        %1447 = vmatprep.subr.bf16.mxu0 0
        %1448 = vmatpush1.bf16.msra.mxu0 0
        %1449 = vmatprep.subr.bf16.mxu0 0
        %1450 = vmatpush1.bf16.msra.mxu0 0
        %1451 = vmatprep.subr.bf16.mxu0 0
        %1452 = vmatpush1.bf16.msra.mxu0 0
        %1453 = vmatprep.subr.bf16.mxu0 0
        %1454 = vmatpush1.bf16.msra.mxu0 0
        %1455 = vmatprep.subr.bf16.mxu0 0
        %1456 = vmatpush1.bf16.msra.mxu0 0
        %1457 = vmatprep.subr.bf16.mxu0 0
        %1458 = vmatpush1.bf16.msra.mxu0 0
        %1459 = vmatprep.subr.bf16.mxu0 0
        %1460 = vmatpush1.bf16.msra.mxu0 0
        %1461 = vmatprep.subr.bf16.mxu0 0
        %1462 = vmatpush1.bf16.msra.mxu0 0
        %1463 = vmatprep.mubr.bf16.mxu0 0
        %1464 = vmatmul.mubr.bf16.gmra.mrb[0].mxu0 %v1429
        %v1465 = vpop.f32.mrb[0].mxu0
        %v1466 = vadd.f32 %v1414, %v1465
        %v1467 = vpop.f32.mrb[0].mxu0
        %v1468 = vpop.f32.mrb[0].mxu0
        %v1469 = vadd.f32 %v1414, %v1468
        %v1470 = vpop.f32.mrb[0].mxu0
        %1471 = vdwg.mxu0
        %v1472 = vmul.f32 %v1399, 0.35355338
        %v1473 = vpack.c.bf16 %v1472, %v1472
        %v1474 = vpack.c.bf16 %v1469, %v1466
        %v1476 = vsel %vm783, %v1473, 0
        %v1479 = vsel %vm783, %v1474, 0
        %1481 = vmatprep.subr.bf16.mxu0 0
        %1482 = vmatpush1.bf16.xpose.msra.mxu0 %v1479
        %1483 = vmatprep.subr.bf16.mxu0 0
        %1484 = vmatpush1.bf16.xpose.msra.mxu0 0
        %1485 = vmatprep.subr.bf16.mxu0 0
        %1486 = vmatpush1.bf16.xpose.msra.mxu0 0
        %1487 = vmatprep.subr.bf16.mxu0 0
        %1488 = vmatpush1.bf16.xpose.msra.mxu0 0
        %1489 = vmatprep.subr.bf16.mxu0 0
        %1490 = vmatpush1.bf16.xpose.msra.mxu0 0
        %1491 = vmatprep.subr.bf16.mxu0 0
        %1492 = vmatpush1.bf16.xpose.msra.mxu0 0
        %1493 = vmatprep.subr.bf16.mxu0 0
        %1494 = vmatpush1.bf16.xpose.msra.mxu0 0
        %1495 = vmatprep.subr.bf16.mxu0 0
        %1496 = vmatpush1.bf16.xpose.msra.mxu0 0
        %1497 = vmatprep.subr.bf16.mxu0 0
        %1498 = vmatpush1.bf16.xpose.msra.mxu0 0
        %1499 = vmatprep.subr.bf16.mxu0 0
        %1500 = vmatpush1.bf16.xpose.msra.mxu0 0
        %1501 = vmatprep.subr.bf16.mxu0 0
        %1502 = vmatpush1.bf16.xpose.msra.mxu0 0
        %1503 = vmatprep.subr.bf16.mxu0 0
        %1504 = vmatpush1.bf16.xpose.msra.mxu0 0
        %1505 = vmatprep.subr.bf16.mxu0 0
        %1506 = vmatpush1.bf16.xpose.msra.mxu0 0
        %1507 = vmatprep.subr.bf16.mxu0 0
        %1508 = vmatpush1.bf16.xpose.msra.mxu0 0
        %1509 = vmatprep.subr.bf16.mxu0 0
        %1510 = vmatpush1.bf16.xpose.msra.mxu0 0
        %1511 = vmatprep.subr.bf16.mxu0 0
        %1512 = vmatpush1.bf16.xpose.msra.mxu0 0
        %1513 = vmatprep.mubr.bf16.mxu0 0
        %1514 = vmatmul.mubr.bf16.gmra.mrb[0].mxu0 %v1476
        %v1515 = vpop.f32.mrb[0].mxu0
        %v1516 = vadd.f32 0.0, %v1515
        %v1517 = vpop.f32.mrb[0].mxu0
        %v1518 = vpop.f32.mrb[0].mxu0
        %v1519 = vpop.f32.mrb[0].mxu0
        %1520 = vdwg.mxu0
        %vm1521 = vcmask 97280
        %v1522 = vsel %vm1521, %v1516, -inf
        %1523 = vmax.xlane.f32.xlu0 %v1522
        %v1524 = vpop.xlane.xlu0 %1523
        %v1525 = vsub.f32 %v1516, %v1524
        %v1526 = vmul.f32 %v1525, 1.442695
        %v1527 = vpow.pop %v1526
        %v1528 = vsel %vm1521, %v1527, 0.0
        %1529 = vadd.xlane.f32.xlu0 %v1528
        %v1530 = vpop.xlane.xlu0 %1529
        %v1531 = vrcp.pop %v1530
        %v1532 = vmul.f32 %v1527, %v1531
        %v1533 = vpack.c.bf16 %v1532, %v1532
        %1535 = vrot.lane.b32.xlu0 %v1474, 96
        %v1536 = vpop.permute.xlu0 %1535
        %v1538 = vsel %vm1521, %v1533, 0
        %vm1540 = vcmask 1045504
        %v1542 = vsel %vm1540, %v1536, 0
        %1544 = vmatprep.subr.bf16.mxu0 0
        %1545 = vmatpush1.bf16.msra.mxu0 %v1542
        %1546 = vmatprep.subr.bf16.mxu0 0
        %1547 = vmatpush1.bf16.msra.mxu0 0
        %1548 = vmatprep.subr.bf16.mxu0 0
        %1549 = vmatpush1.bf16.msra.mxu0 0
        %1550 = vmatprep.subr.bf16.mxu0 0
        %1551 = vmatpush1.bf16.msra.mxu0 0
        %1552 = vmatprep.subr.bf16.mxu0 0
        %1553 = vmatpush1.bf16.msra.mxu0 0
        %1554 = vmatprep.subr.bf16.mxu0 0
        %1555 = vmatpush1.bf16.msra.mxu0 0
        %1556 = vmatprep.subr.bf16.mxu0 0
        %1557 = vmatpush1.bf16.msra.mxu0 0
        %1558 = vmatprep.subr.bf16.mxu0 0
        %1559 = vmatpush1.bf16.msra.mxu0 0
        %1560 = vmatprep.subr.bf16.mxu0 0
        %1561 = vmatpush1.bf16.msra.mxu0 0
        %1562 = vmatprep.subr.bf16.mxu0 0
        %1563 = vmatpush1.bf16.msra.mxu0 0
        %1564 = vmatprep.subr.bf16.mxu0 0
        %1565 = vmatpush1.bf16.msra.mxu0 0
        %1566 = vmatprep.subr.bf16.mxu0 0
        %1567 = vmatpush1.bf16.msra.mxu0 0
        %1568 = vmatprep.subr.bf16.mxu0 0
        %1569 = vmatpush1.bf16.msra.mxu0 0
        %1570 = vmatprep.subr.bf16.mxu0 0
        %1571 = vmatpush1.bf16.msra.mxu0 0
        %1572 = vmatprep.subr.bf16.mxu0 0
        %1573 = vmatpush1.bf16.msra.mxu0 0
        %1574 = vmatprep.subr.bf16.mxu0 0
        %1575 = vmatpush1.bf16.msra.mxu0 0
        %1576 = vmatprep.mubr.bf16.mxu0 0
        %1577 = vmatmul.mubr.bf16.gmra.mrb[0].mxu0 %v1538
        %v1578 = vpop.f32.mrb[0].mxu0
        %v1579 = vadd.f32 0.0, %v1578
        %v1580 = vpop.f32.mrb[0].mxu0
        %v1581 = vpop.f32.mrb[0].mxu0
        %v1582 = vpop.f32.mrb[0].mxu0
        %1583 = vdwg.mxu0
        %1585 = vrot.lane.b32.xlu0 %v1473, 120
        %v1586 = vpop.permute.xlu0 %1585
        %1587 = vrot.lane.b32.xlu0 %v1474, 120
        %v1588 = vpop.permute.xlu0 %1587
        %v1590 = vsel %vm783, %v1586, 0
        %v1593 = vsel %vm783, %v1588, 0
        %1595 = vmatprep.subr.bf16.mxu0 0
        %1596 = vmatpush1.bf16.xpose.msra.mxu0 %v1593
        %1597 = vmatprep.subr.bf16.mxu0 0
        %1598 = vmatpush1.bf16.xpose.msra.mxu0 0
        %1599 = vmatprep.subr.bf16.mxu0 0
        %1600 = vmatpush1.bf16.xpose.msra.mxu0 0
        %1601 = vmatprep.subr.bf16.mxu0 0
        %1602 = vmatpush1.bf16.xpose.msra.mxu0 0
        %1603 = vmatprep.subr.bf16.mxu0 0
        %1604 = vmatpush1.bf16.xpose.msra.mxu0 0
        %1605 = vmatprep.subr.bf16.mxu0 0
        %1606 = vmatpush1.bf16.xpose.msra.mxu0 0
        %1607 = vmatprep.subr.bf16.mxu0 0
        %1608 = vmatpush1.bf16.xpose.msra.mxu0 0
        %1609 = vmatprep.subr.bf16.mxu0 0
        %1610 = vmatpush1.bf16.xpose.msra.mxu0 0
        %1611 = vmatprep.subr.bf16.mxu0 0
        %1612 = vmatpush1.bf16.xpose.msra.mxu0 0
        %1613 = vmatprep.subr.bf16.mxu0 0
        %1614 = vmatpush1.bf16.xpose.msra.mxu0 0
        %1615 = vmatprep.subr.bf16.mxu0 0
        %1616 = vmatpush1.bf16.xpose.msra.mxu0 0
        %1617 = vmatprep.subr.bf16.mxu0 0
        %1618 = vmatpush1.bf16.xpose.msra.mxu0 0
        %1619 = vmatprep.subr.bf16.mxu0 0
        %1620 = vmatpush1.bf16.xpose.msra.mxu0 0
        %1621 = vmatprep.subr.bf16.mxu0 0
        %1622 = vmatpush1.bf16.xpose.msra.mxu0 0
        %1623 = vmatprep.subr.bf16.mxu0 0
        %1624 = vmatpush1.bf16.xpose.msra.mxu0 0
        %1625 = vmatprep.subr.bf16.mxu0 0
        %1626 = vmatpush1.bf16.xpose.msra.mxu0 0
        %1627 = vmatprep.mubr.bf16.mxu0 0
        %1628 = vmatmul.mubr.bf16.gmra.mrb[0].mxu0 %v1590
        %v1629 = vpop.f32.mrb[0].mxu0
        %v1630 = vadd.f32 0.0, %v1629
        %v1631 = vpop.f32.mrb[0].mxu0
        %v1632 = vpop.f32.mrb[0].mxu0
        %v1633 = vpop.f32.mrb[0].mxu0
        %1634 = vdwg.mxu0
        %v1635 = vsel %vm1521, %v1630, -inf
        %1636 = vmax.xlane.f32.xlu0 %v1635
        %v1637 = vpop.xlane.xlu0 %1636
        %v1638 = vsub.f32 %v1630, %v1637
        %v1639 = vmul.f32 %v1638, 1.442695
        %v1640 = vpow.pop %v1639
        %v1641 = vsel %vm1521, %v1640, 0.0
        %1642 = vadd.xlane.f32.xlu0 %v1641
        %v1643 = vpop.xlane.xlu0 %1642
        %v1644 = vrcp.pop %v1643
        %v1645 = vmul.f32 %v1640, %v1644
        %v1646 = vpack.c.bf16 %v1645, %v1645
        %1647 = vrot.lane.b32.xlu0 %v1474, 88
        %v1648 = vpop.permute.xlu0 %1647
        %v1650 = vsel %vm1521, %v1646, 0
        %v1653 = vsel %vm1540, %v1648, 0
        %1655 = vmatprep.subr.bf16.mxu0 0
        %1656 = vmatpush1.bf16.msra.mxu0 %v1653
        %1657 = vmatprep.subr.bf16.mxu0 0
        %1658 = vmatpush1.bf16.msra.mxu0 0
        %1659 = vmatprep.subr.bf16.mxu0 0
        %1660 = vmatpush1.bf16.msra.mxu0 0
        %1661 = vmatprep.subr.bf16.mxu0 0
        %1662 = vmatpush1.bf16.msra.mxu0 0
        %1663 = vmatprep.subr.bf16.mxu0 0
        %1664 = vmatpush1.bf16.msra.mxu0 0
        %1665 = vmatprep.subr.bf16.mxu0 0
        %1666 = vmatpush1.bf16.msra.mxu0 0
        %1667 = vmatprep.subr.bf16.mxu0 0
        %1668 = vmatpush1.bf16.msra.mxu0 0
        %1669 = vmatprep.subr.bf16.mxu0 0
        %1670 = vmatpush1.bf16.msra.mxu0 0
        %1671 = vmatprep.subr.bf16.mxu0 0
        %1672 = vmatpush1.bf16.msra.mxu0 0
        %1673 = vmatprep.subr.bf16.mxu0 0
        %1674 = vmatpush1.bf16.msra.mxu0 0
        %1675 = vmatprep.subr.bf16.mxu0 0
        %1676 = vmatpush1.bf16.msra.mxu0 0
        %1677 = vmatprep.subr.bf16.mxu0 0
        %1678 = vmatpush1.bf16.msra.mxu0 0
        %1679 = vmatprep.subr.bf16.mxu0 0
        %1680 = vmatpush1.bf16.msra.mxu0 0
        %1681 = vmatprep.subr.bf16.mxu0 0
        %1682 = vmatpush1.bf16.msra.mxu0 0
        %1683 = vmatprep.subr.bf16.mxu0 0
        %1684 = vmatpush1.bf16.msra.mxu0 0
        %1685 = vmatprep.subr.bf16.mxu0 0
        %1686 = vmatpush1.bf16.msra.mxu0 0
        %1687 = vmatprep.mubr.bf16.mxu0 0
        %1688 = vmatmul.mubr.bf16.gmra.mrb[0].mxu0 %v1650
        %v1689 = vpop.f32.mrb[0].mxu0
        %v1690 = vadd.f32 0.0, %v1689
        %v1691 = vpop.f32.mrb[0].mxu0
        %v1692 = vpop.f32.mrb[0].mxu0
        %v1693 = vpop.f32.mrb[0].mxu0
        %1694 = vdwg.mxu0
        %1695 = vrot.lane.b32.xlu0 %v1473, 112
        %v1696 = vpop.permute.xlu0 %1695
        %1697 = vrot.lane.b32.xlu0 %v1474, 112
        %v1698 = vpop.permute.xlu0 %1697
        %v1700 = vsel %vm783, %v1696, 0
        %v1703 = vsel %vm783, %v1698, 0
        %1705 = vmatprep.subr.bf16.mxu0 0
        %1706 = vmatpush1.bf16.xpose.msra.mxu0 %v1703
        %1707 = vmatprep.subr.bf16.mxu0 0
        %1708 = vmatpush1.bf16.xpose.msra.mxu0 0
        %1709 = vmatprep.subr.bf16.mxu0 0
        %1710 = vmatpush1.bf16.xpose.msra.mxu0 0
        %1711 = vmatprep.subr.bf16.mxu0 0
        %1712 = vmatpush1.bf16.xpose.msra.mxu0 0
        %1713 = vmatprep.subr.bf16.mxu0 0
        %1714 = vmatpush1.bf16.xpose.msra.mxu0 0
        %1715 = vmatprep.subr.bf16.mxu0 0
        %1716 = vmatpush1.bf16.xpose.msra.mxu0 0
        %1717 = vmatprep.subr.bf16.mxu0 0
        %1718 = vmatpush1.bf16.xpose.msra.mxu0 0
        %1719 = vmatprep.subr.bf16.mxu0 0
        %1720 = vmatpush1.bf16.xpose.msra.mxu0 0
        %1721 = vmatprep.subr.bf16.mxu0 0
        %1722 = vmatpush1.bf16.xpose.msra.mxu0 0
        %1723 = vmatprep.subr.bf16.mxu0 0
        %1724 = vmatpush1.bf16.xpose.msra.mxu0 0
        %1725 = vmatprep.subr.bf16.mxu0 0
        %1726 = vmatpush1.bf16.xpose.msra.mxu0 0
        %1727 = vmatprep.subr.bf16.mxu0 0
        %1728 = vmatpush1.bf16.xpose.msra.mxu0 0
        %1729 = vmatprep.subr.bf16.mxu0 0
        %1730 = vmatpush1.bf16.xpose.msra.mxu0 0
        %1731 = vmatprep.subr.bf16.mxu0 0
        %1732 = vmatpush1.bf16.xpose.msra.mxu0 0
        %1733 = vmatprep.subr.bf16.mxu0 0
        %1734 = vmatpush1.bf16.xpose.msra.mxu0 0
        %1735 = vmatprep.subr.bf16.mxu0 0
        %1736 = vmatpush1.bf16.xpose.msra.mxu0 0
        %1737 = vmatprep.mubr.bf16.mxu0 0
        %1738 = vmatmul.mubr.bf16.gmra.mrb[0].mxu0 %v1700
        %v1739 = vpop.f32.mrb[0].mxu0
        %v1740 = vadd.f32 0.0, %v1739
        %v1741 = vpop.f32.mrb[0].mxu0
        %v1742 = vpop.f32.mrb[0].mxu0
        %v1743 = vpop.f32.mrb[0].mxu0
        %1744 = vdwg.mxu0
        %v1745 = vsel %vm1521, %v1740, -inf
        %1746 = vmax.xlane.f32.xlu0 %v1745
        %v1747 = vpop.xlane.xlu0 %1746
        %v1748 = vsub.f32 %v1740, %v1747
        %v1749 = vmul.f32 %v1748, 1.442695
        %v1750 = vpow.pop %v1749
        %v1751 = vsel %vm1521, %v1750, 0.0
        %1752 = vadd.xlane.f32.xlu0 %v1751
        %v1753 = vpop.xlane.xlu0 %1752
        %v1754 = vrcp.pop %v1753
        %v1755 = vmul.f32 %v1750, %v1754
        %v1756 = vpack.c.bf16 %v1755, %v1755
        %1757 = vrot.lane.b32.xlu0 %v1474, 80
        %v1758 = vpop.permute.xlu0 %1757
        %v1760 = vsel %vm1521, %v1756, 0
        %v1763 = vsel %vm1540, %v1758, 0
        %1765 = vmatprep.subr.bf16.mxu0 0
        %1766 = vmatpush1.bf16.msra.mxu0 %v1763
        %1767 = vmatprep.subr.bf16.mxu0 0
        %1768 = vmatpush1.bf16.msra.mxu0 0
        %1769 = vmatprep.subr.bf16.mxu0 0
        %1770 = vmatpush1.bf16.msra.mxu0 0
        %1771 = vmatprep.subr.bf16.mxu0 0
        %1772 = vmatpush1.bf16.msra.mxu0 0
        %1773 = vmatprep.subr.bf16.mxu0 0
        %1774 = vmatpush1.bf16.msra.mxu0 0
        %1775 = vmatprep.subr.bf16.mxu0 0
        %1776 = vmatpush1.bf16.msra.mxu0 0
        %1777 = vmatprep.subr.bf16.mxu0 0
        %1778 = vmatpush1.bf16.msra.mxu0 0
        %1779 = vmatprep.subr.bf16.mxu0 0
        %1780 = vmatpush1.bf16.msra.mxu0 0
        %1781 = vmatprep.subr.bf16.mxu0 0
        %1782 = vmatpush1.bf16.msra.mxu0 0
        %1783 = vmatprep.subr.bf16.mxu0 0
        %1784 = vmatpush1.bf16.msra.mxu0 0
        %1785 = vmatprep.subr.bf16.mxu0 0
        %1786 = vmatpush1.bf16.msra.mxu0 0
        %1787 = vmatprep.subr.bf16.mxu0 0
        %1788 = vmatpush1.bf16.msra.mxu0 0
        %1789 = vmatprep.subr.bf16.mxu0 0
        %1790 = vmatpush1.bf16.msra.mxu0 0
        %1791 = vmatprep.subr.bf16.mxu0 0
        %1792 = vmatpush1.bf16.msra.mxu0 0
        %1793 = vmatprep.subr.bf16.mxu0 0
        %1794 = vmatpush1.bf16.msra.mxu0 0
        %1795 = vmatprep.subr.bf16.mxu0 0
        %1796 = vmatpush1.bf16.msra.mxu0 0
        %1797 = vmatprep.mubr.bf16.mxu0 0
        %1798 = vmatmul.mubr.bf16.gmra.mrb[0].mxu0 %v1760
        %v1799 = vpop.f32.mrb[0].mxu0
        %v1800 = vadd.f32 0.0, %v1799
        %v1801 = vpop.f32.mrb[0].mxu0
        %v1802 = vpop.f32.mrb[0].mxu0
        %v1803 = vpop.f32.mrb[0].mxu0
        %1804 = vdwg.mxu0
        %1805 = vrot.lane.b32.xlu0 %v1473, 104
        %v1806 = vpop.permute.xlu0 %1805
        %1807 = vrot.lane.b32.xlu0 %v1474, 104
        %v1808 = vpop.permute.xlu0 %1807
        %v1810 = vsel %vm783, %v1806, 0
        %v1813 = vsel %vm783, %v1808, 0
        %1815 = vmatprep.subr.bf16.mxu0 0
        %1816 = vmatpush1.bf16.xpose.msra.mxu0 %v1813
        %1817 = vmatprep.subr.bf16.mxu0 0
        %1818 = vmatpush1.bf16.xpose.msra.mxu0 0
        %1819 = vmatprep.subr.bf16.mxu0 0
        %1820 = vmatpush1.bf16.xpose.msra.mxu0 0
        %1821 = vmatprep.subr.bf16.mxu0 0
        %1822 = vmatpush1.bf16.xpose.msra.mxu0 0
        %1823 = vmatprep.subr.bf16.mxu0 0
        %1824 = vmatpush1.bf16.xpose.msra.mxu0 0
        %1825 = vmatprep.subr.bf16.mxu0 0
        %1826 = vmatpush1.bf16.xpose.msra.mxu0 0
        %1827 = vmatprep.subr.bf16.mxu0 0
        %1828 = vmatpush1.bf16.xpose.msra.mxu0 0
        %1829 = vmatprep.subr.bf16.mxu0 0
        %1830 = vmatpush1.bf16.xpose.msra.mxu0 0
        %1831 = vmatprep.subr.bf16.mxu0 0
        %1832 = vmatpush1.bf16.xpose.msra.mxu0 0
        %1833 = vmatprep.subr.bf16.mxu0 0
        %1834 = vmatpush1.bf16.xpose.msra.mxu0 0
        %1835 = vmatprep.subr.bf16.mxu0 0
        %1836 = vmatpush1.bf16.xpose.msra.mxu0 0
        %1837 = vmatprep.subr.bf16.mxu0 0
        %1838 = vmatpush1.bf16.xpose.msra.mxu0 0
        %1839 = vmatprep.subr.bf16.mxu0 0
        %1840 = vmatpush1.bf16.xpose.msra.mxu0 0
        %1841 = vmatprep.subr.bf16.mxu0 0
        %1842 = vmatpush1.bf16.xpose.msra.mxu0 0
        %1843 = vmatprep.subr.bf16.mxu0 0
        %1844 = vmatpush1.bf16.xpose.msra.mxu0 0
        %1845 = vmatprep.subr.bf16.mxu0 0
        %1846 = vmatpush1.bf16.xpose.msra.mxu0 0
        %1847 = vmatprep.mubr.bf16.mxu0 0
        %1848 = vmatmul.mubr.bf16.gmra.mrb[0].mxu0 %v1810
        %v1849 = vpop.f32.mrb[0].mxu0
        %v1850 = vadd.f32 0.0, %v1849
        %v1851 = vpop.f32.mrb[0].mxu0
        %v1852 = vpop.f32.mrb[0].mxu0
        %v1853 = vpop.f32.mrb[0].mxu0
        %1854 = vdwg.mxu0
        %v1855 = vsel %vm1521, %v1850, -inf
        %1856 = vmax.xlane.f32.xlu0 %v1855
        %v1857 = vpop.xlane.xlu0 %1856
        %v1858 = vsub.f32 %v1850, %v1857
        %v1859 = vmul.f32 %v1858, 1.442695
        %v1860 = vpow.pop %v1859
        %v1861 = vsel %vm1521, %v1860, 0.0
        %1862 = vadd.xlane.f32.xlu0 %v1861
        %v1863 = vpop.xlane.xlu0 %1862
        %v1864 = vrcp.pop %v1863
        %v1865 = vmul.f32 %v1860, %v1864
        %v1866 = vpack.c.bf16 %v1865, %v1865
        %1867 = vrot.lane.b32.xlu0 %v1474, 72
        %v1868 = vpop.permute.xlu0 %1867
        %v1870 = vsel %vm1521, %v1866, 0
        %v1873 = vsel %vm1540, %v1868, 0
        %1875 = vmatprep.subr.bf16.mxu0 0
        %1876 = vmatpush1.bf16.msra.mxu0 %v1873
        %1877 = vmatprep.subr.bf16.mxu0 0
        %1878 = vmatpush1.bf16.msra.mxu0 0
        %1879 = vmatprep.subr.bf16.mxu0 0
        %1880 = vmatpush1.bf16.msra.mxu0 0
        %1881 = vmatprep.subr.bf16.mxu0 0
        %1882 = vmatpush1.bf16.msra.mxu0 0
        %1883 = vmatprep.subr.bf16.mxu0 0
        %1884 = vmatpush1.bf16.msra.mxu0 0
        %1885 = vmatprep.subr.bf16.mxu0 0
        %1886 = vmatpush1.bf16.msra.mxu0 0
        %1887 = vmatprep.subr.bf16.mxu0 0
        %1888 = vmatpush1.bf16.msra.mxu0 0
        %1889 = vmatprep.subr.bf16.mxu0 0
        %1890 = vmatpush1.bf16.msra.mxu0 0
        %1891 = vmatprep.subr.bf16.mxu0 0
        %1892 = vmatpush1.bf16.msra.mxu0 0
        %1893 = vmatprep.subr.bf16.mxu0 0
        %1894 = vmatpush1.bf16.msra.mxu0 0
        %1895 = vmatprep.subr.bf16.mxu0 0
        %1896 = vmatpush1.bf16.msra.mxu0 0
        %1897 = vmatprep.subr.bf16.mxu0 0
        %1898 = vmatpush1.bf16.msra.mxu0 0
        %1899 = vmatprep.subr.bf16.mxu0 0
        %1900 = vmatpush1.bf16.msra.mxu0 0
        %1901 = vmatprep.subr.bf16.mxu0 0
        %1902 = vmatpush1.bf16.msra.mxu0 0
        %1903 = vmatprep.subr.bf16.mxu0 0
        %1904 = vmatpush1.bf16.msra.mxu0 0
        %1905 = vmatprep.subr.bf16.mxu0 0
        %1906 = vmatpush1.bf16.msra.mxu0 0
        %1907 = vmatprep.mubr.bf16.mxu0 0
        %1908 = vmatmul.mubr.bf16.gmra.mrb[0].mxu0 %v1870
        %v1909 = vpop.f32.mrb[0].mxu0
        %v1910 = vadd.f32 0.0, %v1909
        %v1911 = vpop.f32.mrb[0].mxu0
        %v1912 = vpop.f32.mrb[0].mxu0
        %v1913 = vpop.f32.mrb[0].mxu0
        %1914 = vdwg.mxu0
        %1916 = vrot.lane.b32.xlu0 %v1690, 8
        %v1917 = vpop.permute.xlu0 %1916
        %1920 = vrot.lane.b32.xlu0 %v1800, 16
        %v1921 = vpop.permute.xlu0 %1920
        %1924 = vrot.lane.b32.xlu0 %v1910, 24
        %v1925 = vpop.permute.xlu0 %1924
        %v1927 = vsel %vm783, %v1579, %v1917
        %v1928 = vsel %vm1235, %v1927, %v1921
        %v1929 = vsel %vm1237, %v1928, %v1925
        %v1930 = vpack.c.bf16 %v1929, %v1929
        %v1931 = vld [vmem:[%s10] sm:$0xf]
        %v1932 = vld [vmem:[%s10 + $0x4] sm:$0xf]
        %v1933 = vld [vmem:[%s10 + $0x8] sm:$0xf]
        %v1934 = vld [vmem:[%s10 + $0xc] sm:$0xf]
        %v1935 = vld [vmem:[%s11] sm:$0x1]
        %v1937 = vlaneseq
        %v1938 = vshrl.u32 %v1937, 7
        %v1939 = vsub.s32 0, %v1938
        %v1940 = vrot.slane %v1935, %v1939
        %v1946 = vunpack.c.l.b16 %v1931
        %v1947 = vunpack.c.l.b16 %v1932
        %v1948 = vunpack.c.l.b16 %v1933
        %v1949 = vunpack.c.l.b16 %v1934
        %v1950 = vpack.c.b16 %v1947, %v1946
        %v1951 = vpack.c.b16 %v1949, %v1948
        %v1955 = vsel %vm727, %v1930, 0
        %1957 = vmatprep.subr.bf16.mxu0 0
        %1958 = vmatpush1.bf16.msra.mxu0 %v1950
        %1959 = vmatprep.subr.bf16.mxu0 0
        %1960 = vmatpush1.bf16.msra.mxu0 %v1951
        %1961 = vmatprep.subr.bf16.mxu0 0
        %1962 = vmatpush1.bf16.msra.mxu0 0
        %1963 = vmatprep.subr.bf16.mxu0 0
        %1964 = vmatpush1.bf16.msra.mxu0 0
        %1965 = vmatprep.subr.bf16.mxu0 0
        %1966 = vmatpush1.bf16.msra.mxu0 0
        %1967 = vmatprep.subr.bf16.mxu0 0
        %1968 = vmatpush1.bf16.msra.mxu0 0
        %1969 = vmatprep.subr.bf16.mxu0 0
        %1970 = vmatpush1.bf16.msra.mxu0 0
        %1971 = vmatprep.subr.bf16.mxu0 0
        %1972 = vmatpush1.bf16.msra.mxu0 0
        %1973 = vmatprep.subr.bf16.mxu0 0
        %1974 = vmatpush1.bf16.msra.mxu0 0
        %1975 = vmatprep.subr.bf16.mxu0 0
        %1976 = vmatpush1.bf16.msra.mxu0 0
        %1977 = vmatprep.subr.bf16.mxu0 0
        %1978 = vmatpush1.bf16.msra.mxu0 0
        %1979 = vmatprep.subr.bf16.mxu0 0
        %1980 = vmatpush1.bf16.msra.mxu0 0
        %1981 = vmatprep.subr.bf16.mxu0 0
        %1982 = vmatpush1.bf16.msra.mxu0 0
        %1983 = vmatprep.subr.bf16.mxu0 0
        %1984 = vmatpush1.bf16.msra.mxu0 0
        %1985 = vmatprep.subr.bf16.mxu0 0
        %1986 = vmatpush1.bf16.msra.mxu0 0
        %1987 = vmatprep.subr.bf16.mxu0 0
        %1988 = vmatpush1.bf16.msra.mxu0 0
        %1989 = vmatprep.mubr.bf16.mxu0 0
        %1990 = vmatmul.mubr.bf16.gmra.mrb[0].mxu0 %v1955
        %v1991 = vpop.f32.mrb[0].mxu0
        %v1992 = vadd.f32 %v1940, %v1991
        %v1993 = vpop.f32.mrb[0].mxu0
        %v1994 = vpop.f32.mrb[0].mxu0
        %v1995 = vpop.f32.mrb[0].mxu0
        %1996 = vdwg.mxu0
        %v1997 = vadd.f32 %v1336, %v1992
        %v1998 = vld [vmem:[%s14] sm:$0x1]
        %v1999 = vld [vmem:[%s15] sm:$0x1]
        %v2000 = vsel %vm727, %v1997, 0.0
        %2001 = vadd.xlane.f32.xlu0 %v2000
        %v2002 = vpop.xlane.xlu0 %2001
        %v2003 = vmul.f32 %v2002, %v1312
        %v2004 = vsub.f32 %v1997, %v2003
        %v2005 = vmul.f32 %v2004, %v2004
        %v2006 = vsel %vm727, %v2005, 0.0
        %2007 = vadd.xlane.f32.xlu0 %v2006
        %v2008 = vpop.xlane.xlu0 %2007
        %v2009 = vmul.f32 %v2008, %v1312
        %v2010 = vadd.f32 %v2009, 1e-05
        %v2011 = vrsqrt.pop %v2010
        %v2012 = vmul.f32 %v2004, %v2011
        %v2014 = vlaneseq
        %v2015 = vshrl.u32 %v2014, 7
        %v2016 = vsub.s32 0, %v2015
        %v2017 = vrot.slane %v1998, %v2016
        %v2019 = vmul.f32 %v2012, %v2017
        %v2021 = vlaneseq
        %v2022 = vshrl.u32 %v2021, 7
        %v2023 = vsub.s32 0, %v2022
        %v2024 = vrot.slane %v1999, %v2023
        %v2026 = vadd.f32 %v2019, %v2024
        %v2027 = vpack.c.bf16 %v2026, %v2026
        %v2028 = vld [vmem:[%s18] sm:$0xf]
        %v2029 = vld [vmem:[%s18 + $0x4] sm:$0xf]
        %v2030 = vld [vmem:[%s18 + $0x8] sm:$0xf]
        %v2031 = vld [vmem:[%s18 + $0xc] sm:$0xf]
        %v2032 = vld [vmem:[%s19] sm:$0x1]
        %v2034 = vlaneseq
        %v2035 = vshrl.u32 %v2034, 7
        %v2036 = vsub.s32 0, %v2035
        %v2037 = vrot.slane %v2032, %v2036
        %v2043 = vunpack.c.l.b16 %v2028
        %v2044 = vunpack.c.l.b16 %v2029
        %v2045 = vunpack.c.l.b16 %v2030
        %v2046 = vunpack.c.l.b16 %v2031
        %v2047 = vpack.c.b16 %v2044, %v2043
        %v2048 = vpack.c.b16 %v2046, %v2045
        %v2052 = vsel %vm727, %v2027, 0
        %2054 = vmatprep.subr.bf16.mxu0 0
        %2055 = vmatpush1.bf16.msra.mxu0 %v2047
        %2056 = vmatprep.subr.bf16.mxu0 0
        %2057 = vmatpush1.bf16.msra.mxu0 %v2048
        %2058 = vmatprep.subr.bf16.mxu0 0
        %2059 = vmatpush1.bf16.msra.mxu0 0
        %2060 = vmatprep.subr.bf16.mxu0 0
        %2061 = vmatpush1.bf16.msra.mxu0 0
        %2062 = vmatprep.subr.bf16.mxu0 0
        %2063 = vmatpush1.bf16.msra.mxu0 0
        %2064 = vmatprep.subr.bf16.mxu0 0
        %2065 = vmatpush1.bf16.msra.mxu0 0
        %2066 = vmatprep.subr.bf16.mxu0 0
        %2067 = vmatpush1.bf16.msra.mxu0 0
        %2068 = vmatprep.subr.bf16.mxu0 0
        %2069 = vmatpush1.bf16.msra.mxu0 0
        %2070 = vmatprep.subr.bf16.mxu0 0
        %2071 = vmatpush1.bf16.msra.mxu0 0
        %2072 = vmatprep.subr.bf16.mxu0 0
        %2073 = vmatpush1.bf16.msra.mxu0 0
        %2074 = vmatprep.subr.bf16.mxu0 0
        %2075 = vmatpush1.bf16.msra.mxu0 0
        %2076 = vmatprep.subr.bf16.mxu0 0
        %2077 = vmatpush1.bf16.msra.mxu0 0
        %2078 = vmatprep.subr.bf16.mxu0 0
        %2079 = vmatpush1.bf16.msra.mxu0 0
        %2080 = vmatprep.subr.bf16.mxu0 0
        %2081 = vmatpush1.bf16.msra.mxu0 0
        %2082 = vmatprep.subr.bf16.mxu0 0
        %2083 = vmatpush1.bf16.msra.mxu0 0
        %2084 = vmatprep.subr.bf16.mxu0 0
        %2085 = vmatpush1.bf16.msra.mxu0 0
        %2086 = vmatprep.mubr.bf16.mxu0 0
        %2087 = vmatmul.mubr.bf16.gmra.mrb[0].mxu0 %v2052
        %v2088 = vpop.f32.mrb[0].mxu0
        %v2089 = vadd.f32 %v2037, %v2088
        %v2090 = vpop.f32.mrb[0].mxu0
        %v2091 = vpop.f32.mrb[0].mxu0
        %v2092 = vpop.f32.mrb[0].mxu0
        %2093 = vdwg.mxu0
        %v2094 = vmax.f32 %v2089, 0.0
        %v2095 = vpack.c.bf16 %v2094, %v2094
        %v2096 = vld [vmem:[%s20] sm:$0xf]
        %v2097 = vld [vmem:[%s20 + $0x4] sm:$0xf]
        %v2098 = vld [vmem:[%s20 + $0x8] sm:$0xf]
        %v2099 = vld [vmem:[%s20 + $0xc] sm:$0xf]
        %v2100 = vld [vmem:[%s20 + $0x10] sm:$0xf]
        %v2101 = vld [vmem:[%s20 + $0x14] sm:$0xf]
        %v2102 = vld [vmem:[%s20 + $0x18] sm:$0xf]
        %v2103 = vld [vmem:[%s20 + $0x1c] sm:$0xf]
        %v2104 = vld [vmem:[%s20 + $0x20] sm:$0xf]
        %v2105 = vld [vmem:[%s20 + $0x24] sm:$0xf]
        %v2106 = vld [vmem:[%s20 + $0x28] sm:$0xf]
        %v2107 = vld [vmem:[%s20 + $0x2c] sm:$0xf]
        %v2108 = vld [vmem:[%s20 + $0x30] sm:$0xf]
        %v2109 = vld [vmem:[%s20 + $0x34] sm:$0xf]
        %v2110 = vld [vmem:[%s20 + $0x38] sm:$0xf]
        %v2111 = vld [vmem:[%s20 + $0x3c] sm:$0xf]
        %v2112 = vld [vmem:[%s21] sm:$0x1]
        %v2114 = vlaneseq
        %v2115 = vshrl.u32 %v2114, 7
        %v2116 = vsub.s32 0, %v2115
        %v2117 = vrot.slane %v2112, %v2116
        %v2135 = vunpack.c.l.b16 %v2096
        %v2136 = vunpack.c.l.b16 %v2097
        %v2137 = vunpack.c.l.b16 %v2098
        %v2138 = vunpack.c.l.b16 %v2099
        %v2139 = vunpack.c.l.b16 %v2100
        %v2140 = vunpack.c.l.b16 %v2101
        %v2141 = vunpack.c.l.b16 %v2102
        %v2142 = vunpack.c.l.b16 %v2103
        %v2143 = vunpack.c.l.b16 %v2104
        %v2144 = vunpack.c.l.b16 %v2105
        %v2145 = vunpack.c.l.b16 %v2106
        %v2146 = vunpack.c.l.b16 %v2107
        %v2147 = vunpack.c.l.b16 %v2108
        %v2148 = vunpack.c.l.b16 %v2109
        %v2149 = vunpack.c.l.b16 %v2110
        %v2150 = vunpack.c.l.b16 %v2111
        %v2151 = vpack.c.b16 %v2136, %v2135
        %v2152 = vpack.c.b16 %v2138, %v2137
        %v2153 = vpack.c.b16 %v2140, %v2139
        %v2154 = vpack.c.b16 %v2142, %v2141
        %v2155 = vpack.c.b16 %v2144, %v2143
        %v2156 = vpack.c.b16 %v2146, %v2145
        %v2157 = vpack.c.b16 %v2148, %v2147
        %v2158 = vpack.c.b16 %v2150, %v2149
        %2167 = vmatprep.subr.bf16.mxu0 0
        %2168 = vmatpush1.bf16.msra.mxu0 %v2151
        %2169 = vmatprep.subr.bf16.mxu0 0
        %2170 = vmatpush1.bf16.msra.mxu0 %v2152
        %2171 = vmatprep.subr.bf16.mxu0 0
        %2172 = vmatpush1.bf16.msra.mxu0 %v2153
        %2173 = vmatprep.subr.bf16.mxu0 0
        %2174 = vmatpush1.bf16.msra.mxu0 %v2154
        %2175 = vmatprep.subr.bf16.mxu0 0
        %2176 = vmatpush1.bf16.msra.mxu0 %v2155
        %2177 = vmatprep.subr.bf16.mxu0 0
        %2178 = vmatpush1.bf16.msra.mxu0 %v2156
        %2179 = vmatprep.subr.bf16.mxu0 0
        %2180 = vmatpush1.bf16.msra.mxu0 %v2157
        %2181 = vmatprep.subr.bf16.mxu0 0
        %2182 = vmatpush1.bf16.msra.mxu0 %v2158
        %2183 = vmatprep.subr.bf16.mxu0 0
        %2184 = vmatpush1.bf16.msra.mxu0 0
        %2185 = vmatprep.subr.bf16.mxu0 0
        %2186 = vmatpush1.bf16.msra.mxu0 0
        %2187 = vmatprep.subr.bf16.mxu0 0
        %2188 = vmatpush1.bf16.msra.mxu0 0
        %2189 = vmatprep.subr.bf16.mxu0 0
        %2190 = vmatpush1.bf16.msra.mxu0 0
        %2191 = vmatprep.subr.bf16.mxu0 0
        %2192 = vmatpush1.bf16.msra.mxu0 0
        %2193 = vmatprep.subr.bf16.mxu0 0
        %2194 = vmatpush1.bf16.msra.mxu0 0
        %2195 = vmatprep.subr.bf16.mxu0 0
        %2196 = vmatpush1.bf16.msra.mxu0 0
        %2197 = vmatprep.subr.bf16.mxu0 0
        %2198 = vmatpush1.bf16.msra.mxu0 0
        %2199 = vmatprep.mubr.bf16.mxu0 0
        %2200 = vmatmul.mubr.bf16.gmra.mrb[0].mxu0 %v2095
        %v2201 = vpop.f32.mrb[0].mxu0
        %v2202 = vadd.f32 %v2117, %v2201
        %v2203 = vpop.f32.mrb[0].mxu0
        %v2204 = vpop.f32.mrb[0].mxu0
        %v2205 = vpop.f32.mrb[0].mxu0
        %2206 = vdwg.mxu0
        %v2207 = vadd.f32 %v2026, %v2202
        %v2208 = vld [vmem:[%s16] sm:$0x1]
        %v2209 = vld [vmem:[%s17] sm:$0x1]
        %v2210 = vsel %vm727, %v2207, 0.0
        %2211 = vadd.xlane.f32.xlu0 %v2210
        %v2212 = vpop.xlane.xlu0 %2211
        %v2213 = vmul.f32 %v2212, %v1312
        %v2214 = vsub.f32 %v2207, %v2213
        %v2215 = vmul.f32 %v2214, %v2214
        %v2216 = vsel %vm727, %v2215, 0.0
        %2217 = vadd.xlane.f32.xlu0 %v2216
        %v2218 = vpop.xlane.xlu0 %2217
        %v2219 = vmul.f32 %v2218, %v1312
        %v2220 = vadd.f32 %v2219, 1e-05
        %v2221 = vrsqrt.pop %v2220
        %v2222 = vmul.f32 %v2214, %v2221
        %v2224 = vlaneseq
        %v2225 = vshrl.u32 %v2224, 7
        %v2226 = vsub.s32 0, %v2225
        %v2227 = vrot.slane %v2208, %v2226
        %v2229 = vmul.f32 %v2222, %v2227
        %v2231 = vlaneseq
        %v2232 = vshrl.u32 %v2231, 7
        %v2233 = vsub.s32 0, %v2232
        %v2234 = vrot.slane %v2209, %v2233
        %v2236 = vadd.f32 %v2229, %v2234
        %2237 = vst.msk [vmem:[%s689] sm:$0xff] %vm727, %v2236
        %s2238 = sand.u32 %s516, 1
        %s2239 = scalar_lea.sflag [#allocation3], %s2238
        %s2240 = sand.u32 %s516, 1
        %s2241 = smul.addr %s2240, 8
        %s2242 = scalar_lea.vmem [#allocation2], %s2241
        // Predicated region
        $region109: #{decoder_layer_forward.1} parent=107 // pred_check
          %p2243 = pneg %p526
        $region110: #{decoder_layer_forward.1} parent=107 // pred_check_branch
          %2245 = sbr.rel (%p2243) target = $region112
        $region111: #{decoder_layer_forward.1} parent=107 // pred_region
          %s2247 = ssub.s32 128, 128
          %2248 = vsyncadd %s2239, %s2247
          %s2249 = smul.addr %s36, 128
          %s2250 = scalar_lea.hbm %s22, %s2249
          %s2252 = sshll.u32 %s2242, 4
          %s2253 = int_to_ptr.vmem [resolvable:$true] %s2252
          %2255 = dma.vmem_to_hbm [thread:$0]  %s2253, 128, %s2250, %s2239
        $region112: #{decoder_layer_forward.1} parent=107 // pred_fallthru
          _
      $region108: #{decoder_layer_forward.1} parent=5 // pred_fallthru
        _
      %p2256 = scmp.le.s32.totalorder 2, %s31
      // Predicated region
      $region113: #{decoder_layer_forward.1} parent=5 // pred_check
        %p2257 = pneg %p2256
      $region114: #{decoder_layer_forward.1} parent=5 // pred_check_branch
        %2259 = sbr.rel (%p2257) target = $region116
      $region115: #{decoder_layer_forward.1} parent=5 // pred_region
        %s2260 = ssub.s32 %s31, 2
        // Predicated region
        $region117: #{decoder_layer_forward.1} parent=115 // pred_check
          %p2261 = pneg %p532
        $region118: #{decoder_layer_forward.1} parent=115 // pred_check_branch
          %2263 = sbr.rel (%p2261) target = $region120
        $region119: #{decoder_layer_forward.1} parent=115 // pred_region
          %s2264 = sand.u32 %s517, 1
          %s2265 = scalar_lea.sflag [#allocation3], %s2264
          %s2266 = sand.u32 %s517, 1
          %s2267 = smul.addr %s2266, 8
          %s2268 = scalar_lea.vmem [#allocation2], %s2267
          %2269 = dma.done %s2265, 128
        $region120: #{decoder_layer_forward.1} parent=115 // pred_fallthru
          _
      $region116: #{decoder_layer_forward.1} parent=5 // pred_fallthru
        _
    $region6: #{decoder_layer_forward.1} parent=1 // loop_footer
      %s35 = sadd.s32 1, %s31
    $region7: #{decoder_layer_forward.1} parent=1 // loop_footer_branch
      %30 = sbr.rel target = $region3
    $region8: #{decoder_layer_forward.1} parent=1 // loop_exit
      _
    %2270 = vsyncpa [#allocation3], 1
    %s2271 = scalar_lea.sflag [#allocation3], 1
    %2272 = vsyncpa %s2271, 1

</llo_original>
